<compile_context>
chip_gen: v5e
topology: v5e:2x2
jax: 0.10.0
libtpu: 0.0.40
codegen_flags: <defaults>
</compile_context>

<pallas_src>
import jax
import jax.numpy as jnp
from jax import lax
from jax.experimental import pallas as pl
from jax.experimental.pallas import tpu as pltpu  # noqa: F401  (TPU backend)

B, C, H, W = 4, 4, 16, 16
HW = H * W
PROJ = 32        # args.projection_size (encoder output features)
HID = 512        # projection-head hidden width (nn.Linear(proj, 512, bias=False))
NPROJ = 16       # args.train.n_proj
TEMP = 0.5       # NT-Xent temperature
EPS_BN = 1e-5


# ---------------------------------------------------------------------------
# im2col glue (plain JAX; XLA fuses the pad/slice/transpose chain into one op)
# TODO(synk): full resnet18 backbone is external to this module; a 3x3 conv +
#             ReLU + global-average-pool stand-in with the same
#             [B, projection_size] output contract is implemented instead.
# ---------------------------------------------------------------------------
def _im2col_3x3(x):
    """x: [N, C, H, W] -> patches [N*H*W, C*9] (zero padding, stride 1)."""
    n, c, h, w = x.shape
    xp = jnp.pad(x, ((0, 0), (0, 0), (1, 1), (1, 1)))
    cols = [xp[:, :, dh:dh + h, dw:dw + w] for dh in range(3) for dw in range(3)]
    p = jnp.stack(cols, axis=2)                                  # [N, C, 9, H, W]
    p = p.transpose(0, 3, 4, 1, 2)                               # [N, H, W, C, 9]
    return p.reshape(n * h * w, c * 9)                           # [N*HW, C*9]


# ---------------------------------------------------------------------------
# Fused SimCLR kernel: encoder f + projection head g (both views) + NT-Xent
# ---------------------------------------------------------------------------
def _simclr_kernel(p_ref, wc_ref, w1_ref, g_ref, b_ref, w2_ref, b2_ref, loss_ref):
    n2 = 2 * B

    # ---- encoder f: 3x3 conv (as matmul over im2col patches) + ReLU + GAP ----
    h = jnp.dot(p_ref[...], wc_ref[...], preferred_element_type=jnp.float32)  # (2B*HW, PROJ)
    h = jnp.maximum(h, 0.0)

    # Global average pool expressed as a pooling matmul: pool[n, m] = 1/HW iff
    # row m belongs to sample n.  Keeps everything 2D / MXU-friendly.
    pr = lax.broadcasted_iota(jnp.int32, (n2, n2 * HW), 0)
    pc = lax.broadcasted_iota(jnp.int32, (n2, n2 * HW), 1)
    lo = pr * HW
    pool = jnp.where((pc >= lo) & (pc < lo + HW),
                     jnp.float32(1.0 / HW), jnp.float32(0.0))
    feat = jnp.dot(pool, h, preferred_element_type=jnp.float32)               # (2B, PROJ)

    # ---- projection head g: Linear(no bias) -> BatchNorm1d -> ReLU -> Linear ----
    h1 = jnp.dot(feat, w1_ref[...], preferred_element_type=jnp.float32)       # (2B, HID)

    # BatchNorm1d in training mode with PER-VIEW batch statistics (matches
    # calling self.g(feat_x) and self.g(feat_y) separately in the reference).
    row = lax.broadcasted_iota(jnp.int32, (n2, 1), 0)
    in_x = (row < B).astype(jnp.float32)                                      # (2B, 1)
    in_y = 1.0 - in_x
    mu_x = jnp.sum(h1 * in_x, axis=0, keepdims=True) / B
    mu_y = jnp.sum(h1 * in_y, axis=0, keepdims=True) / B
    mu = in_x * mu_x + in_y * mu_y
    d = h1 - mu
    var_x = jnp.sum(d * d * in_x, axis=0, keepdims=True) / B                  # biased var
    var_y = jnp.sum(d * d * in_y, axis=0, keepdims=True) / B
    var = in_x * var_x + in_y * var_y
    hn = d * lax.rsqrt(var + EPS_BN)
    hn = hn * g_ref[...] + b_ref[...]
    hn = jnp.maximum(hn, 0.0)
    z = jnp.dot(hn, w2_ref[...], preferred_element_type=jnp.float32) + b2_ref[...]  # (2B, NPROJ)

    # ---- NT-Xent contrastive loss (rows 0..B-1 = view x, B..2B-1 = view y) ----
    # TODO(synk): `criterion` is injected from outside in the PyTorch module;
    #             the canonical SimCLR NT-Xent loss is implemented here.
    norm = jnp.sqrt(jnp.sum(z * z, axis=-1, keepdims=True))
    zn = z / jnp.maximum(norm, 1e-12)                                          # F.normalize
    sim = jnp.dot(zn, zn.T, preferred_element_type=jnp.float32) / TEMP         # (2B, 2B)
    ri = lax.broadcasted_iota(jnp.int32, (n2, n2), 0)
    ci = lax.broadcasted_iota(jnp.int32, (n2, n2), 1)
    sim = jnp.where(ri == ci, jnp.float32(-1e30), sim)                         # mask self-pairs
    pos_col = jnp.where(ri < B, ri + B, ri - B)
    pos = jnp.sum(jnp.where(ci == pos_col, sim, 0.0), axis=-1, keepdims=True)  # (2B, 1)
    m = jnp.max(sim, axis=-1, keepdims=True)
    lse = jnp.log(jnp.sum(jnp.exp(sim - m), axis=-1, keepdims=True)) + m       # (2B, 1)
    per_row = lse - pos
    loss_ref[...] = jnp.sum(per_row, axis=0, keepdims=True) / n2               # (1, 1)


def simclr_loss(patches, params):
    return pl.pallas_call(
        _simclr_kernel,
        out_shape=jax.ShapeDtypeStruct((1, 1), jnp.float32),
    )(patches, params["w_conv"], params["w1"], params["gamma"], params["beta"],
      params["w2"], params["b2"])


# ---------------------------------------------------------------------------
# SimCLR.forward
# ---------------------------------------------------------------------------
@jax.jit
def simclr_forward(x, y, params):
    # TODO(synk): .cuda(device=...) transfers have no Pallas equivalent; arrays
    #             are already device-resident under JAX.
    xy = jnp.concatenate([x, y], axis=0)            # both views, one pass: (2B, C, H, W)
    patches = _im2col_3x3(xy)                       # (2B*HW, C*9) — single glue fusion
    loss = simclr_loss(patches, params)[0, 0]
    return loss, {"simclr": loss}


if __name__ == "__main__":
    key = jax.random.PRNGKey(0)
    kx, ky, kc, k1, k2 = jax.random.split(key, 5)

    x = jax.random.normal(kx, (B, C, H, W), jnp.float32)
    y = jax.random.normal(ky, (B, C, H, W), jnp.float32)

    params = {
        # encoder: 3x3 conv weight flattened to [C*9, PROJ]
        "w_conv": 0.1 * jax.random.normal(kc, (C * 9, PROJ), jnp.float32),
        # projection head (weights stored [in, out]; synthetic deterministic init)
        "w1": 0.05 * jax.random.normal(k1, (PROJ, HID), jnp.float32),
        "gamma": jnp.ones((1, HID), jnp.float32),
        "beta": jnp.zeros((1, HID), jnp.float32),
        "w2": 0.05 * jax.random.normal(k2, (HID, NPROJ), jnp.float32),
        "b2": jnp.zeros((1, NPROJ), jnp.float32),
    }

    loss, loss_dict = simclr_forward(x, y, params)
    jax.block_until_ready(loss)
    assert jnp.isfinite(loss)
    print("KERNEL_OK")
</pallas_src>

<mosaic_0001>
module attributes {stable_mosaic.version = 11 : i64} {
  func.func @_simclr_kernel(%arg0: memref<2048x36xf32, #tpu.memory_space<vmem>>, %arg1: memref<36x32xf32, #tpu.memory_space<vmem>>, %arg2: memref<32x512xf32, #tpu.memory_space<vmem>>, %arg3: memref<1x512xf32, #tpu.memory_space<vmem>>, %arg4: memref<1x512xf32, #tpu.memory_space<vmem>>, %arg5: memref<512x16xf32, #tpu.memory_space<vmem>>, %arg6: memref<1x16xf32, #tpu.memory_space<vmem>>, %arg7: memref<1x1xf32, #tpu.memory_space<vmem>>) attributes {dimension_semantics = [], scalar_prefetch = 0 : i64, scratch_operands = 0 : i64, tpu.core_type = #tpu.core_type<tc>} {
    %c0 = arith.constant 0 : index
    %c0_0 = arith.constant 0 : index
    %0 = vector.load %arg0[%c0, %c0_0] : memref<2048x36xf32, #tpu.memory_space<vmem>>, vector<2048x36xf32>
    %c0_1 = arith.constant 0 : index
    %c0_2 = arith.constant 0 : index
    %1 = vector.load %arg1[%c0_1, %c0_2] : memref<36x32xf32, #tpu.memory_space<vmem>>, vector<36x32xf32>
    %cst = arith.constant dense<0.000000e+00> : vector<2048x32xf32>
    %2 = tpu.matmul %0, %1, %cst {dimension_numbers = #tpu.dot_dimension_numbers<[1], [0], [0], [1], [0, 0, 1, 1], [], []>} : vector<2048x36xf32>, vector<36x32xf32>, vector<2048x32xf32> -> vector<2048x32xf32>
    %cst_3 = arith.constant 0.000000e+00 : f32
    %3 = vector.broadcast %cst_3 : f32 to vector<2048x32xf32>
    %4 = arith.maximumf %2, %3 : vector<2048x32xf32>
    %5 = tpu.iota {dimensions = array<i32: 0>} : vector<8x2048xi32>
    %6 = tpu.iota {dimensions = array<i32: 1>} : vector<8x2048xi32>
    %c256_i32 = arith.constant 256 : i32
    %7 = vector.broadcast %c256_i32 : i32 to vector<8x2048xi32>
    %8 = arith.muli %5, %7 : vector<8x2048xi32>
    %9 = arith.cmpi sge, %6, %8 : vector<8x2048xi32>
    %c256_i32_4 = arith.constant 256 : i32
    %10 = vector.broadcast %c256_i32_4 : i32 to vector<8x2048xi32>
    %11 = arith.addi %8, %10 : vector<8x2048xi32>
    %12 = arith.cmpi slt, %6, %11 : vector<8x2048xi32>
    %13 = arith.andi %9, %12 : vector<8x2048xi1>
    %cst_5 = arith.constant 3.906250e-03 : f32
    %cst_6 = arith.constant 0.000000e+00 : f32
    %14 = vector.broadcast %cst_5 : f32 to vector<8x2048xf32>
    %15 = vector.broadcast %cst_6 : f32 to vector<8x2048xf32>
    %16 = arith.select %13, %14, %15 : vector<8x2048xi1>, vector<8x2048xf32>
    %cst_7 = arith.constant dense<0.000000e+00> : vector<8x32xf32>
    %17 = tpu.matmul %16, %4, %cst_7 {dimension_numbers = #tpu.dot_dimension_numbers<[1], [0], [0], [1], [0, 0, 1, 1], [], []>} : vector<8x2048xf32>, vector<2048x32xf32>, vector<8x32xf32> -> vector<8x32xf32>
    %c0_8 = arith.constant 0 : index
    %c0_9 = arith.constant 0 : index
    %18 = vector.load %arg2[%c0_8, %c0_9] : memref<32x512xf32, #tpu.memory_space<vmem>>, vector<32x512xf32>
    %cst_10 = arith.constant dense<0.000000e+00> : vector<8x512xf32>
    %19 = tpu.matmul %17, %18, %cst_10 {dimension_numbers = #tpu.dot_dimension_numbers<[1], [0], [0], [1], [0, 0, 1, 1], [], []>} : vector<8x32xf32>, vector<32x512xf32>, vector<8x512xf32> -> vector<8x512xf32>
    %20 = tpu.iota {dimensions = array<i32: 0>} : vector<8x1xi32>
    %c4_i32 = arith.constant 4 : i32
    %21 = vector.broadcast %c4_i32 : i32 to vector<8x1xi32>
    %22 = arith.cmpi slt, %20, %21 : vector<8x1xi32>
    %23 = arith.extui %22 : vector<8x1xi1> to vector<8x1xi32>
    %24 = arith.sitofp %23 : vector<8x1xi32> to vector<8x1xf32>
    %cst_11 = arith.constant 1.000000e+00 : f32
    %25 = vector.broadcast %cst_11 : f32 to vector<8x1xf32>
    %26 = arith.subf %25, %24 : vector<8x1xf32>
    %27 = vector.broadcast %24 : vector<8x1xf32> to vector<8x512xf32>
    %28 = arith.mulf %19, %27 : vector<8x512xf32>
    %cst_12 = arith.constant dense<0.000000e+00> : vector<512xf32>
    %29 = vector.multi_reduction <add>, %28, %cst_12 [0] : vector<8x512xf32> to vector<512xf32>
    %30 = vector.shape_cast %29 : vector<512xf32> to vector<1x512xf32>
    %cst_13 = arith.constant 4.000000e+00 : f32
    %31 = vector.broadcast %cst_13 : f32 to vector<1x512xf32>
    %32 = arith.divf %30, %31 : vector<1x512xf32>
    %33 = vector.broadcast %26 : vector<8x1xf32> to vector<8x512xf32>
    %34 = arith.mulf %19, %33 : vector<8x512xf32>
    %cst_14 = arith.constant dense<0.000000e+00> : vector<512xf32>
    %35 = vector.multi_reduction <add>, %34, %cst_14 [0] : vector<8x512xf32> to vector<512xf32>
    %36 = vector.shape_cast %35 : vector<512xf32> to vector<1x512xf32>
    %cst_15 = arith.constant 4.000000e+00 : f32
    %37 = vector.broadcast %cst_15 : f32 to vector<1x512xf32>
    %38 = arith.divf %36, %37 : vector<1x512xf32>
    %39 = vector.broadcast %24 : vector<8x1xf32> to vector<8x512xf32>
    %40 = vector.broadcast %32 : vector<1x512xf32> to vector<8x512xf32>
    %41 = arith.mulf %39, %40 : vector<8x512xf32>
    %42 = vector.broadcast %26 : vector<8x1xf32> to vector<8x512xf32>
    %43 = vector.broadcast %38 : vector<1x512xf32> to vector<8x512xf32>
    %44 = arith.mulf %42, %43 : vector<8x512xf32>
    %45 = arith.addf %41, %44 : vector<8x512xf32>
    %46 = arith.subf %19, %45 : vector<8x512xf32>
    %47 = arith.mulf %46, %46 : vector<8x512xf32>
    %48 = vector.broadcast %24 : vector<8x1xf32> to vector<8x512xf32>
    %49 = arith.mulf %47, %48 : vector<8x512xf32>
    %cst_16 = arith.constant dense<0.000000e+00> : vector<512xf32>
    %50 = vector.multi_reduction <add>, %49, %cst_16 [0] : vector<8x512xf32> to vector<512xf32>
    %51 = vector.shape_cast %50 : vector<512xf32> to vector<1x512xf32>
    %cst_17 = arith.constant 4.000000e+00 : f32
    %52 = vector.broadcast %cst_17 : f32 to vector<1x512xf32>
    %53 = arith.divf %51, %52 : vector<1x512xf32>
    %54 = arith.mulf %46, %46 : vector<8x512xf32>
    %55 = vector.broadcast %26 : vector<8x1xf32> to vector<8x512xf32>
    %56 = arith.mulf %54, %55 : vector<8x512xf32>
    %cst_18 = arith.constant dense<0.000000e+00> : vector<512xf32>
    %57 = vector.multi_reduction <add>, %56, %cst_18 [0] : vector<8x512xf32> to vector<512xf32>
    %58 = vector.shape_cast %57 : vector<512xf32> to vector<1x512xf32>
    %cst_19 = arith.constant 4.000000e+00 : f32
    %59 = vector.broadcast %cst_19 : f32 to vector<1x512xf32>
    %60 = arith.divf %58, %59 : vector<1x512xf32>
    %61 = vector.broadcast %24 : vector<8x1xf32> to vector<8x512xf32>
    %62 = vector.broadcast %53 : vector<1x512xf32> to vector<8x512xf32>
    %63 = arith.mulf %61, %62 : vector<8x512xf32>
    %64 = vector.broadcast %26 : vector<8x1xf32> to vector<8x512xf32>
    %65 = vector.broadcast %60 : vector<1x512xf32> to vector<8x512xf32>
    %66 = arith.mulf %64, %65 : vector<8x512xf32>
    %67 = arith.addf %63, %66 : vector<8x512xf32>
    %cst_20 = arith.constant 9.99999974E-6 : f32
    %68 = vector.broadcast %cst_20 : f32 to vector<8x512xf32>
    %69 = arith.addf %67, %68 : vector<8x512xf32>
    %70 = math.rsqrt %69 : vector<8x512xf32>
    %71 = arith.mulf %46, %70 : vector<8x512xf32>
    %c0_21 = arith.constant 0 : index
    %c0_22 = arith.constant 0 : index
    %72 = vector.load %arg3[%c0_21, %c0_22] : memref<1x512xf32, #tpu.memory_space<vmem>>, vector<1x512xf32>
    %73 = vector.broadcast %72 : vector<1x512xf32> to vector<8x512xf32>
    %74 = arith.mulf %71, %73 : vector<8x512xf32>
    %c0_23 = arith.constant 0 : index
    %c0_24 = arith.constant 0 : index
    %75 = vector.load %arg4[%c0_23, %c0_24] : memref<1x512xf32, #tpu.memory_space<vmem>>, vector<1x512xf32>
    %76 = vector.broadcast %75 : vector<1x512xf32> to vector<8x512xf32>
    %77 = arith.addf %74, %76 : vector<8x512xf32>
    %cst_25 = arith.constant 0.000000e+00 : f32
    %78 = vector.broadcast %cst_25 : f32 to vector<8x512xf32>
    %79 = arith.maximumf %77, %78 : vector<8x512xf32>
    %c0_26 = arith.constant 0 : index
    %c0_27 = arith.constant 0 : index
    %80 = vector.load %arg5[%c0_26, %c0_27] : memref<512x16xf32, #tpu.memory_space<vmem>>, vector<512x16xf32>
    %cst_28 = arith.constant dense<0.000000e+00> : vector<8x16xf32>
    %81 = tpu.matmul %79, %80, %cst_28 {dimension_numbers = #tpu.dot_dimension_numbers<[1], [0], [0], [1], [0, 0, 1, 1], [], []>} : vector<8x512xf32>, vector<512x16xf32>, vector<8x16xf32> -> vector<8x16xf32>
    %c0_29 = arith.constant 0 : index
    %c0_30 = arith.constant 0 : index
    %82 = vector.load %arg6[%c0_29, %c0_30] : memref<1x16xf32, #tpu.memory_space<vmem>>, vector<1x16xf32>
    %83 = vector.broadcast %82 : vector<1x16xf32> to vector<8x16xf32>
    %84 = arith.addf %81, %83 : vector<8x16xf32>
    %85 = arith.mulf %84, %84 : vector<8x16xf32>
    %cst_31 = arith.constant dense<0.000000e+00> : vector<8xf32>
    %86 = vector.multi_reduction <add>, %85, %cst_31 [1] : vector<8x16xf32> to vector<8xf32>
    %87 = vector.shape_cast %86 : vector<8xf32> to vector<8x1xf32>
    %88 = math.sqrt %87 : vector<8x1xf32>
    %cst_32 = arith.constant 9.99999996E-13 : f32
    %89 = vector.broadcast %cst_32 : f32 to vector<8x1xf32>
    %90 = arith.maximumf %88, %89 : vector<8x1xf32>
    %91 = vector.broadcast %90 : vector<8x1xf32> to vector<8x16xf32>
    %92 = arith.divf %84, %91 : vector<8x16xf32>
    %93 = tpu.transpose %92, [1, 0] : vector<8x16xf32> -> vector<16x8xf32>
    %cst_33 = arith.constant dense<0.000000e+00> : vector<8x8xf32>
    %94 = tpu.matmul %92, %93, %cst_33 {dimension_numbers = #tpu.dot_dimension_numbers<[1], [0], [0], [1], [0, 0, 1, 1], [], []>} : vector<8x16xf32>, vector<16x8xf32>, vector<8x8xf32> -> vector<8x8xf32>
    %cst_34 = arith.constant 5.000000e-01 : f32
    %95 = vector.broadcast %cst_34 : f32 to vector<8x8xf32>
    %96 = arith.divf %94, %95 : vector<8x8xf32>
    %97 = tpu.iota {dimensions = array<i32: 0>} : vector<8x8xi32>
    %98 = tpu.iota {dimensions = array<i32: 1>} : vector<8x8xi32>
    %99 = arith.cmpi eq, %97, %98 : vector<8x8xi32>
    %cst_35 = arith.constant -1.000000e+30 : f32
    %100 = vector.broadcast %cst_35 : f32 to vector<8x8xf32>
    %101 = arith.select %99, %100, %96 : vector<8x8xi1>, vector<8x8xf32>
    %c4_i32_36 = arith.constant 4 : i32
    %102 = vector.broadcast %c4_i32_36 : i32 to vector<8x8xi32>
    %103 = arith.cmpi slt, %97, %102 : vector<8x8xi32>
    %c4_i32_37 = arith.constant 4 : i32
    %104 = vector.broadcast %c4_i32_37 : i32 to vector<8x8xi32>
    %105 = arith.addi %97, %104 : vector<8x8xi32>
    %c4_i32_38 = arith.constant 4 : i32
    %106 = vector.broadcast %c4_i32_38 : i32 to vector<8x8xi32>
    %107 = arith.subi %97, %106 : vector<8x8xi32>
    %108 = arith.select %103, %105, %107 : vector<8x8xi1>, vector<8x8xi32>
    %109 = arith.cmpi eq, %98, %108 : vector<8x8xi32>
    %cst_39 = arith.constant 0.000000e+00 : f32
    %110 = vector.broadcast %cst_39 : f32 to vector<8x8xf32>
    %111 = arith.select %109, %101, %110 : vector<8x8xi1>, vector<8x8xf32>
    %cst_40 = arith.constant dense<0.000000e+00> : vector<8xf32>
    %112 = vector.multi_reduction <add>, %111, %cst_40 [1] : vector<8x8xf32> to vector<8xf32>
    %113 = vector.shape_cast %112 : vector<8xf32> to vector<8x1xf32>
    %cst_41 = arith.constant dense<0xFF800000> : vector<8xf32>
    %114 = vector.multi_reduction <maximumf>, %101, %cst_41 [1] : vector<8x8xf32> to vector<8xf32>
    %115 = vector.shape_cast %114 : vector<8xf32> to vector<8x1xf32>
    %116 = vector.broadcast %115 : vector<8x1xf32> to vector<8x8xf32>
    %117 = arith.subf %101, %116 : vector<8x8xf32>
    %118 = math.exp %117 : vector<8x8xf32>
    %cst_42 = arith.constant dense<0.000000e+00> : vector<8xf32>
    %119 = vector.multi_reduction <add>, %118, %cst_42 [1] : vector<8x8xf32> to vector<8xf32>
    %120 = vector.shape_cast %119 : vector<8xf32> to vector<8x1xf32>
    %121 = math.log %120 : vector<8x1xf32>
    %122 = arith.addf %121, %115 : vector<8x1xf32>
    %123 = arith.subf %122, %113 : vector<8x1xf32>
    %cst_43 = arith.constant dense<0.000000e+00> : vector<1xf32>
    %124 = vector.multi_reduction <add>, %123, %cst_43 [0] : vector<8x1xf32> to vector<1xf32>
    %125 = vector.shape_cast %124 : vector<1xf32> to vector<1x1xf32>
    %cst_44 = arith.constant 8.000000e+00 : f32
    %126 = vector.broadcast %cst_44 : f32 to vector<1x1xf32>
    %127 = arith.divf %125, %126 : vector<1x1xf32>
    %c0_45 = arith.constant 0 : index
    %c0_46 = arith.constant 0 : index
    %128 = vector.load %arg7[%c0_45, %c0_46] : memref<1x1xf32, #tpu.memory_space<vmem>>, vector<1x1xf32>
    tpu.vector_store %arg7[%c0_45, %c0_46], %127 {strides = array<i32>} : memref<1x1xf32, #tpu.memory_space<vmem>>, vector<1x1xf32>,
    return
  }
}

</mosaic_0001>

<llo_original>
// kernel: simclr_forward.1
$region0: #{simclr_forward.1}
  #allocation0 [shape = 'u32[]', space=smem, size = 0x4, offset = 0x4, fixed_abs, tag = 'smem constant byte address 0x4 - core index']
  #allocation1 [shape = 'u32[72,128]{1,0:T(1,128)}', space=vmem, size = 0x9000, scoped, tag = 'internal scratch']
  %s0 = inlined_call_operand.vmem [shape: f32[2048,36], index: 0, kind: input, shape index: {}]
  %s1 = inlined_call_operand.vmem [shape: f32[36,32], index: 1, kind: input, shape index: {}]
  %s2 = inlined_call_operand.vmem [shape: f32[32,512], index: 2, kind: input, shape index: {}]
  %s3 = inlined_call_operand.vmem [shape: f32[1,512], index: 3, kind: input, shape index: {}]
  %s4 = inlined_call_operand.vmem [shape: f32[1,512], index: 4, kind: input, shape index: {}]
  %s5 = inlined_call_operand.vmem [shape: f32[512,16], index: 5, kind: input, shape index: {}]
  %s6 = inlined_call_operand.vmem [shape: f32[1,16], index: 6, kind: input, shape index: {}]
  %s7 = inlined_call_operand.hbm [shape: f32[1,1], index: 7, kind: output, shape index: {}]
  %s8 = sld [smem:[#allocation0]]
  $region38: #{simclr_forward.1} parent=0
    _
  %s10 = ssub.s32 1, %s8
  %s11 = scalar_select 0, %s10, %s8
  $region1: #{simclr_forward.1} parent=0
    #allocation2 [shape = 'u8[512]{0}', space=vmem, size = 0x400, scoped, tag = 'output window, operand 0, single buffered']
    #allocation3 [shape = 's32[1]{0}', space=sflag, size = 0x4, scoped, tag = 'scoped memory for simclr_forward.1']
    %12 = vsyncpa [#allocation3], 0
    // Predicated region
    $region2: #{simclr_forward.1} parent=1 // pred_check
      _
    $region3: #{simclr_forward.1} parent=1 // pred_check_branch
      %14 = sbr.rel (0) target = $region5
    $region4: #{simclr_forward.1} parent=1 // pred_region
      _
    $region5: #{simclr_forward.1} parent=1 // pred_fallthru
      _
    // Predicated region
    $region6: #{simclr_forward.1} parent=1 // pred_check
      _
    $region7: #{simclr_forward.1} parent=1 // pred_check_branch
      %16 = sbr.rel (0) target = $region9
    $region8: #{simclr_forward.1} parent=1 // pred_region
      _
    $region9: #{simclr_forward.1} parent=1 // pred_fallthru
      _
    // Predicated region
    $region10: #{simclr_forward.1} parent=1 // pred_check
      _
    $region11: #{simclr_forward.1} parent=1 // pred_check_branch
      %18 = sbr.rel (0) target = $region13
    $region12: #{simclr_forward.1} parent=1 // pred_region
      _
    $region13: #{simclr_forward.1} parent=1 // pred_fallthru
      _
    // Predicated region
    $region14: #{simclr_forward.1} parent=1 // pred_check
      _
    $region15: #{simclr_forward.1} parent=1 // pred_check_branch
      %20 = sbr.rel (0) target = $region17
    $region16: #{simclr_forward.1} parent=1 // pred_region
      _
    $region17: #{simclr_forward.1} parent=1 // pred_fallthru
      _
    // Predicated region
    $region18: #{simclr_forward.1} parent=1 // pred_check
      _
    $region19: #{simclr_forward.1} parent=1 // pred_check_branch
      %22 = sbr.rel (0) target = $region21
    $region20: #{simclr_forward.1} parent=1 // pred_region
      _
    $region21: #{simclr_forward.1} parent=1 // pred_fallthru
      _
    // Predicated region
    $region22: #{simclr_forward.1} parent=1 // pred_check
      _
    $region23: #{simclr_forward.1} parent=1 // pred_check_branch
      %24 = sbr.rel (0) target = $region25
    $region24: #{simclr_forward.1} parent=1 // pred_region
      _
    $region25: #{simclr_forward.1} parent=1 // pred_fallthru
      _
    // Predicated region
    $region26: #{simclr_forward.1} parent=1 // pred_check
      _
    $region27: #{simclr_forward.1} parent=1 // pred_check_branch
      %26 = sbr.rel (0) target = $region29
    $region28: #{simclr_forward.1} parent=1 // pred_region
      _
    $region29: #{simclr_forward.1} parent=1 // pred_fallthru
      _
    %v27 = vld [vmem:[%s0] sm:$0xff]
    %v28 = vld [vmem:[%s0 + $0x8] sm:$0xff]
    %v29 = vld [vmem:[%s0 + $0x10] sm:$0xff]
    %v30 = vld [vmem:[%s0 + $0x18] sm:$0xff]
    %v31 = vld [vmem:[%s0 + $0x20] sm:$0xff]
    %v32 = vld [vmem:[%s0 + $0x28] sm:$0xff]
    %v33 = vld [vmem:[%s0 + $0x30] sm:$0xff]
    %v34 = vld [vmem:[%s0 + $0x38] sm:$0xff]
    %v35 = vld [vmem:[%s0 + $0x40] sm:$0xff]
    %v36 = vld [vmem:[%s0 + $0x48] sm:$0xff]
    %v37 = vld [vmem:[%s0 + $0x50] sm:$0xff]
    %v38 = vld [vmem:[%s0 + $0x58] sm:$0xff]
    %v39 = vld [vmem:[%s0 + $0x60] sm:$0xff]
    %v40 = vld [vmem:[%s0 + $0x68] sm:$0xff]
    %v41 = vld [vmem:[%s0 + $0x70] sm:$0xff]
    %v42 = vld [vmem:[%s0 + $0x78] sm:$0xff]
    %v43 = vld [vmem:[%s0 + $0x80] sm:$0xff]
    %v44 = vld [vmem:[%s0 + $0x88] sm:$0xff]
    %v45 = vld [vmem:[%s0 + $0x90] sm:$0xff]
    %v46 = vld [vmem:[%s0 + $0x98] sm:$0xff]
    %v47 = vld [vmem:[%s0 + $0xa0] sm:$0xff]
    %v48 = vld [vmem:[%s0 + $0xa8] sm:$0xff]
    %v49 = vld [vmem:[%s0 + $0xb0] sm:$0xff]
    %v50 = vld [vmem:[%s0 + $0xb8] sm:$0xff]
    %v51 = vld [vmem:[%s0 + $0xc0] sm:$0xff]
    %v52 = vld [vmem:[%s0 + $0xc8] sm:$0xff]
    %v53 = vld [vmem:[%s0 + $0xd0] sm:$0xff]
    %v54 = vld [vmem:[%s0 + $0xd8] sm:$0xff]
    %v55 = vld [vmem:[%s0 + $0xe0] sm:$0xff]
    %v56 = vld [vmem:[%s0 + $0xe8] sm:$0xff]
    %v57 = vld [vmem:[%s0 + $0xf0] sm:$0xff]
    %v58 = vld [vmem:[%s0 + $0xf8] sm:$0xff]
    %v59 = vld [vmem:[%s0 + $0x100] sm:$0xff]
    %v60 = vld [vmem:[%s0 + $0x108] sm:$0xff]
    %v61 = vld [vmem:[%s0 + $0x110] sm:$0xff]
    %v62 = vld [vmem:[%s0 + $0x118] sm:$0xff]
    %v63 = vld [vmem:[%s0 + $0x120] sm:$0xff]
    %v64 = vld [vmem:[%s0 + $0x128] sm:$0xff]
    %v65 = vld [vmem:[%s0 + $0x130] sm:$0xff]
    %v66 = vld [vmem:[%s0 + $0x138] sm:$0xff]
    %v67 = vld [vmem:[%s0 + $0x140] sm:$0xff]
    %v68 = vld [vmem:[%s0 + $0x148] sm:$0xff]
    %v69 = vld [vmem:[%s0 + $0x150] sm:$0xff]
    %v70 = vld [vmem:[%s0 + $0x158] sm:$0xff]
    %v71 = vld [vmem:[%s0 + $0x160] sm:$0xff]
    %v72 = vld [vmem:[%s0 + $0x168] sm:$0xff]
    %v73 = vld [vmem:[%s0 + $0x170] sm:$0xff]
    %v74 = vld [vmem:[%s0 + $0x178] sm:$0xff]
    %v75 = vld [vmem:[%s0 + $0x180] sm:$0xff]
    %v76 = vld [vmem:[%s0 + $0x188] sm:$0xff]
    %v77 = vld [vmem:[%s0 + $0x190] sm:$0xff]
    %v78 = vld [vmem:[%s0 + $0x198] sm:$0xff]
    %v79 = vld [vmem:[%s0 + $0x1a0] sm:$0xff]
    %v80 = vld [vmem:[%s0 + $0x1a8] sm:$0xff]
    %v81 = vld [vmem:[%s0 + $0x1b0] sm:$0xff]
    %v82 = vld [vmem:[%s0 + $0x1b8] sm:$0xff]
    %v83 = vld [vmem:[%s0 + $0x1c0] sm:$0xff]
    %v84 = vld [vmem:[%s0 + $0x1c8] sm:$0xff]
    %v85 = vld [vmem:[%s0 + $0x1d0] sm:$0xff]
    %v86 = vld [vmem:[%s0 + $0x1d8] sm:$0xff]
    %v87 = vld [vmem:[%s0 + $0x1e0] sm:$0xff]
    %v88 = vld [vmem:[%s0 + $0x1e8] sm:$0xff]
    %v89 = vld [vmem:[%s0 + $0x1f0] sm:$0xff]
    %v90 = vld [vmem:[%s0 + $0x1f8] sm:$0xff]
    %v91 = vld [vmem:[%s0 + $0x200] sm:$0xff]
    %v92 = vld [vmem:[%s0 + $0x208] sm:$0xff]
    %v93 = vld [vmem:[%s0 + $0x210] sm:$0xff]
    %v94 = vld [vmem:[%s0 + $0x218] sm:$0xff]
    %v95 = vld [vmem:[%s0 + $0x220] sm:$0xff]
    %v96 = vld [vmem:[%s0 + $0x228] sm:$0xff]
    %v97 = vld [vmem:[%s0 + $0x230] sm:$0xff]
    %v98 = vld [vmem:[%s0 + $0x238] sm:$0xff]
    %v99 = vld [vmem:[%s0 + $0x240] sm:$0xff]
    %v100 = vld [vmem:[%s0 + $0x248] sm:$0xff]
    %v101 = vld [vmem:[%s0 + $0x250] sm:$0xff]
    %v102 = vld [vmem:[%s0 + $0x258] sm:$0xff]
    %v103 = vld [vmem:[%s0 + $0x260] sm:$0xff]
    %v104 = vld [vmem:[%s0 + $0x268] sm:$0xff]
    %v105 = vld [vmem:[%s0 + $0x270] sm:$0xff]
    %v106 = vld [vmem:[%s0 + $0x278] sm:$0xff]
    %v107 = vld [vmem:[%s0 + $0x280] sm:$0xff]
    %v108 = vld [vmem:[%s0 + $0x288] sm:$0xff]
    %v109 = vld [vmem:[%s0 + $0x290] sm:$0xff]
    %v110 = vld [vmem:[%s0 + $0x298] sm:$0xff]
    %v111 = vld [vmem:[%s0 + $0x2a0] sm:$0xff]
    %v112 = vld [vmem:[%s0 + $0x2a8] sm:$0xff]
    %v113 = vld [vmem:[%s0 + $0x2b0] sm:$0xff]
    %v114 = vld [vmem:[%s0 + $0x2b8] sm:$0xff]
    %v115 = vld [vmem:[%s0 + $0x2c0] sm:$0xff]
    %v116 = vld [vmem:[%s0 + $0x2c8] sm:$0xff]
    %v117 = vld [vmem:[%s0 + $0x2d0] sm:$0xff]
    %v118 = vld [vmem:[%s0 + $0x2d8] sm:$0xff]
    %v119 = vld [vmem:[%s0 + $0x2e0] sm:$0xff]
    %v120 = vld [vmem:[%s0 + $0x2e8] sm:$0xff]
    %v121 = vld [vmem:[%s0 + $0x2f0] sm:$0xff]
    %v122 = vld [vmem:[%s0 + $0x2f8] sm:$0xff]
    %v123 = vld [vmem:[%s0 + $0x300] sm:$0xff]
    %v124 = vld [vmem:[%s0 + $0x308] sm:$0xff]
    %v125 = vld [vmem:[%s0 + $0x310] sm:$0xff]
    %v126 = vld [vmem:[%s0 + $0x318] sm:$0xff]
    %v127 = vld [vmem:[%s0 + $0x320] sm:$0xff]
    %v128 = vld [vmem:[%s0 + $0x328] sm:$0xff]
    %v129 = vld [vmem:[%s0 + $0x330] sm:$0xff]
    %v130 = vld [vmem:[%s0 + $0x338] sm:$0xff]
    %v131 = vld [vmem:[%s0 + $0x340] sm:$0xff]
    %v132 = vld [vmem:[%s0 + $0x348] sm:$0xff]
    %v133 = vld [vmem:[%s0 + $0x350] sm:$0xff]
    %v134 = vld [vmem:[%s0 + $0x358] sm:$0xff]
    %v135 = vld [vmem:[%s0 + $0x360] sm:$0xff]
    %v136 = vld [vmem:[%s0 + $0x368] sm:$0xff]
    %v137 = vld [vmem:[%s0 + $0x370] sm:$0xff]
    %v138 = vld [vmem:[%s0 + $0x378] sm:$0xff]
    %v139 = vld [vmem:[%s0 + $0x380] sm:$0xff]
    %v140 = vld [vmem:[%s0 + $0x388] sm:$0xff]
    %v141 = vld [vmem:[%s0 + $0x390] sm:$0xff]
    %v142 = vld [vmem:[%s0 + $0x398] sm:$0xff]
    %v143 = vld [vmem:[%s0 + $0x3a0] sm:$0xff]
    %v144 = vld [vmem:[%s0 + $0x3a8] sm:$0xff]
    %v145 = vld [vmem:[%s0 + $0x3b0] sm:$0xff]
    %v146 = vld [vmem:[%s0 + $0x3b8] sm:$0xff]
    %v147 = vld [vmem:[%s0 + $0x3c0] sm:$0xff]
    %v148 = vld [vmem:[%s0 + $0x3c8] sm:$0xff]
    %v149 = vld [vmem:[%s0 + $0x3d0] sm:$0xff]
    %v150 = vld [vmem:[%s0 + $0x3d8] sm:$0xff]
    %v151 = vld [vmem:[%s0 + $0x3e0] sm:$0xff]
    %v152 = vld [vmem:[%s0 + $0x3e8] sm:$0xff]
    %v153 = vld [vmem:[%s0 + $0x3f0] sm:$0xff]
    %v154 = vld [vmem:[%s0 + $0x3f8] sm:$0xff]
    %v155 = vld [vmem:[%s0 + $0x400] sm:$0xff]
    %v156 = vld [vmem:[%s0 + $0x408] sm:$0xff]
    %v157 = vld [vmem:[%s0 + $0x410] sm:$0xff]
    %v158 = vld [vmem:[%s0 + $0x418] sm:$0xff]
    %v159 = vld [vmem:[%s0 + $0x420] sm:$0xff]
    %v160 = vld [vmem:[%s0 + $0x428] sm:$0xff]
    %v161 = vld [vmem:[%s0 + $0x430] sm:$0xff]
    %v162 = vld [vmem:[%s0 + $0x438] sm:$0xff]
    %v163 = vld [vmem:[%s0 + $0x440] sm:$0xff]
    %v164 = vld [vmem:[%s0 + $0x448] sm:$0xff]
    %v165 = vld [vmem:[%s0 + $0x450] sm:$0xff]
    %v166 = vld [vmem:[%s0 + $0x458] sm:$0xff]
    %v167 = vld [vmem:[%s0 + $0x460] sm:$0xff]
    %v168 = vld [vmem:[%s0 + $0x468] sm:$0xff]
    %v169 = vld [vmem:[%s0 + $0x470] sm:$0xff]
    %v170 = vld [vmem:[%s0 + $0x478] sm:$0xff]
    %v171 = vld [vmem:[%s0 + $0x480] sm:$0xff]
    %v172 = vld [vmem:[%s0 + $0x488] sm:$0xff]
    %v173 = vld [vmem:[%s0 + $0x490] sm:$0xff]
    %v174 = vld [vmem:[%s0 + $0x498] sm:$0xff]
    %v175 = vld [vmem:[%s0 + $0x4a0] sm:$0xff]
    %v176 = vld [vmem:[%s0 + $0x4a8] sm:$0xff]
    %v177 = vld [vmem:[%s0 + $0x4b0] sm:$0xff]
    %v178 = vld [vmem:[%s0 + $0x4b8] sm:$0xff]
    %v179 = vld [vmem:[%s0 + $0x4c0] sm:$0xff]
    %v180 = vld [vmem:[%s0 + $0x4c8] sm:$0xff]
    %v181 = vld [vmem:[%s0 + $0x4d0] sm:$0xff]
    %v182 = vld [vmem:[%s0 + $0x4d8] sm:$0xff]
    %v183 = vld [vmem:[%s0 + $0x4e0] sm:$0xff]
    %v184 = vld [vmem:[%s0 + $0x4e8] sm:$0xff]
    %v185 = vld [vmem:[%s0 + $0x4f0] sm:$0xff]
    %v186 = vld [vmem:[%s0 + $0x4f8] sm:$0xff]
    %v187 = vld [vmem:[%s0 + $0x500] sm:$0xff]
    %v188 = vld [vmem:[%s0 + $0x508] sm:$0xff]
    %v189 = vld [vmem:[%s0 + $0x510] sm:$0xff]
    %v190 = vld [vmem:[%s0 + $0x518] sm:$0xff]
    %v191 = vld [vmem:[%s0 + $0x520] sm:$0xff]
    %v192 = vld [vmem:[%s0 + $0x528] sm:$0xff]
    %v193 = vld [vmem:[%s0 + $0x530] sm:$0xff]
    %v194 = vld [vmem:[%s0 + $0x538] sm:$0xff]
    %v195 = vld [vmem:[%s0 + $0x540] sm:$0xff]
    %v196 = vld [vmem:[%s0 + $0x548] sm:$0xff]
    %v197 = vld [vmem:[%s0 + $0x550] sm:$0xff]
    %v198 = vld [vmem:[%s0 + $0x558] sm:$0xff]
    %v199 = vld [vmem:[%s0 + $0x560] sm:$0xff]
    %v200 = vld [vmem:[%s0 + $0x568] sm:$0xff]
    %v201 = vld [vmem:[%s0 + $0x570] sm:$0xff]
    %v202 = vld [vmem:[%s0 + $0x578] sm:$0xff]
    %v203 = vld [vmem:[%s0 + $0x580] sm:$0xff]
    %v204 = vld [vmem:[%s0 + $0x588] sm:$0xff]
    %v205 = vld [vmem:[%s0 + $0x590] sm:$0xff]
    %v206 = vld [vmem:[%s0 + $0x598] sm:$0xff]
    %v207 = vld [vmem:[%s0 + $0x5a0] sm:$0xff]
    %v208 = vld [vmem:[%s0 + $0x5a8] sm:$0xff]
    %v209 = vld [vmem:[%s0 + $0x5b0] sm:$0xff]
    %v210 = vld [vmem:[%s0 + $0x5b8] sm:$0xff]
    %v211 = vld [vmem:[%s0 + $0x5c0] sm:$0xff]
    %v212 = vld [vmem:[%s0 + $0x5c8] sm:$0xff]
    %v213 = vld [vmem:[%s0 + $0x5d0] sm:$0xff]
    %v214 = vld [vmem:[%s0 + $0x5d8] sm:$0xff]
    %v215 = vld [vmem:[%s0 + $0x5e0] sm:$0xff]
    %v216 = vld [vmem:[%s0 + $0x5e8] sm:$0xff]
    %v217 = vld [vmem:[%s0 + $0x5f0] sm:$0xff]
    %v218 = vld [vmem:[%s0 + $0x5f8] sm:$0xff]
    %v219 = vld [vmem:[%s0 + $0x600] sm:$0xff]
    %v220 = vld [vmem:[%s0 + $0x608] sm:$0xff]
    %v221 = vld [vmem:[%s0 + $0x610] sm:$0xff]
    %v222 = vld [vmem:[%s0 + $0x618] sm:$0xff]
    %v223 = vld [vmem:[%s0 + $0x620] sm:$0xff]
    %v224 = vld [vmem:[%s0 + $0x628] sm:$0xff]
    %v225 = vld [vmem:[%s0 + $0x630] sm:$0xff]
    %v226 = vld [vmem:[%s0 + $0x638] sm:$0xff]
    %v227 = vld [vmem:[%s0 + $0x640] sm:$0xff]
    %v228 = vld [vmem:[%s0 + $0x648] sm:$0xff]
    %v229 = vld [vmem:[%s0 + $0x650] sm:$0xff]
    %v230 = vld [vmem:[%s0 + $0x658] sm:$0xff]
    %v231 = vld [vmem:[%s0 + $0x660] sm:$0xff]
    %v232 = vld [vmem:[%s0 + $0x668] sm:$0xff]
    %v233 = vld [vmem:[%s0 + $0x670] sm:$0xff]
    %v234 = vld [vmem:[%s0 + $0x678] sm:$0xff]
    %v235 = vld [vmem:[%s0 + $0x680] sm:$0xff]
    %v236 = vld [vmem:[%s0 + $0x688] sm:$0xff]
    %v237 = vld [vmem:[%s0 + $0x690] sm:$0xff]
    %v238 = vld [vmem:[%s0 + $0x698] sm:$0xff]
    %v239 = vld [vmem:[%s0 + $0x6a0] sm:$0xff]
    %v240 = vld [vmem:[%s0 + $0x6a8] sm:$0xff]
    %v241 = vld [vmem:[%s0 + $0x6b0] sm:$0xff]
    %v242 = vld [vmem:[%s0 + $0x6b8] sm:$0xff]
    %v243 = vld [vmem:[%s0 + $0x6c0] sm:$0xff]
    %v244 = vld [vmem:[%s0 + $0x6c8] sm:$0xff]
    %v245 = vld [vmem:[%s0 + $0x6d0] sm:$0xff]
    %v246 = vld [vmem:[%s0 + $0x6d8] sm:$0xff]
    %v247 = vld [vmem:[%s0 + $0x6e0] sm:$0xff]
    %v248 = vld [vmem:[%s0 + $0x6e8] sm:$0xff]
    %v249 = vld [vmem:[%s0 + $0x6f0] sm:$0xff]
    %v250 = vld [vmem:[%s0 + $0x6f8] sm:$0xff]
    %v251 = vld [vmem:[%s0 + $0x700] sm:$0xff]
    %v252 = vld [vmem:[%s0 + $0x708] sm:$0xff]
    %v253 = vld [vmem:[%s0 + $0x710] sm:$0xff]
    %v254 = vld [vmem:[%s0 + $0x718] sm:$0xff]
    %v255 = vld [vmem:[%s0 + $0x720] sm:$0xff]
    %v256 = vld [vmem:[%s0 + $0x728] sm:$0xff]
    %v257 = vld [vmem:[%s0 + $0x730] sm:$0xff]
    %v258 = vld [vmem:[%s0 + $0x738] sm:$0xff]
    %v259 = vld [vmem:[%s0 + $0x740] sm:$0xff]
    %v260 = vld [vmem:[%s0 + $0x748] sm:$0xff]
    %v261 = vld [vmem:[%s0 + $0x750] sm:$0xff]
    %v262 = vld [vmem:[%s0 + $0x758] sm:$0xff]
    %v263 = vld [vmem:[%s0 + $0x760] sm:$0xff]
    %v264 = vld [vmem:[%s0 + $0x768] sm:$0xff]
    %v265 = vld [vmem:[%s0 + $0x770] sm:$0xff]
    %v266 = vld [vmem:[%s0 + $0x778] sm:$0xff]
    %v267 = vld [vmem:[%s0 + $0x780] sm:$0xff]
    %v268 = vld [vmem:[%s0 + $0x788] sm:$0xff]
    %v269 = vld [vmem:[%s0 + $0x790] sm:$0xff]
    %v270 = vld [vmem:[%s0 + $0x798] sm:$0xff]
    %v271 = vld [vmem:[%s0 + $0x7a0] sm:$0xff]
    %v272 = vld [vmem:[%s0 + $0x7a8] sm:$0xff]
    %v273 = vld [vmem:[%s0 + $0x7b0] sm:$0xff]
    %v274 = vld [vmem:[%s0 + $0x7b8] sm:$0xff]
    %v275 = vld [vmem:[%s0 + $0x7c0] sm:$0xff]
    %v276 = vld [vmem:[%s0 + $0x7c8] sm:$0xff]
    %v277 = vld [vmem:[%s0 + $0x7d0] sm:$0xff]
    %v278 = vld [vmem:[%s0 + $0x7d8] sm:$0xff]
    %v279 = vld [vmem:[%s0 + $0x7e0] sm:$0xff]
    %v280 = vld [vmem:[%s0 + $0x7e8] sm:$0xff]
    %v281 = vld [vmem:[%s0 + $0x7f0] sm:$0xff]
    %v282 = vld [vmem:[%s0 + $0x7f8] sm:$0xff]
    %v283 = vld [vmem:[%s1] sm:$0xff]
    %v284 = vld [vmem:[%s1 + $0x8] sm:$0xff]
    %v285 = vld [vmem:[%s1 + $0x10] sm:$0xff]
    %v286 = vld [vmem:[%s1 + $0x18] sm:$0xff]
    %v287 = vld [vmem:[%s1 + $0x20] sm:$0xf]
    %vm288 = vcmask 293888
    %v290 = vsel %vm288, %v27, 0
    %v293 = vsel %vm288, %v28, 0
    %v296 = vsel %vm288, %v29, 0
    %v299 = vsel %vm288, %v30, 0
    %v302 = vsel %vm288, %v31, 0
    %v305 = vsel %vm288, %v32, 0
    %v308 = vsel %vm288, %v33, 0
    %v311 = vsel %vm288, %v34, 0
    %v314 = vsel %vm288, %v35, 0
    %v317 = vsel %vm288, %v36, 0
    %v320 = vsel %vm288, %v37, 0
    %v323 = vsel %vm288, %v38, 0
    %v326 = vsel %vm288, %v39, 0
    %v329 = vsel %vm288, %v40, 0
    %v332 = vsel %vm288, %v41, 0
    %v335 = vsel %vm288, %v42, 0
    %v338 = vsel %vm288, %v43, 0
    %v341 = vsel %vm288, %v44, 0
    %v344 = vsel %vm288, %v45, 0
    %v347 = vsel %vm288, %v46, 0
    %v350 = vsel %vm288, %v47, 0
    %v353 = vsel %vm288, %v48, 0
    %v356 = vsel %vm288, %v49, 0
    %v359 = vsel %vm288, %v50, 0
    %v362 = vsel %vm288, %v51, 0
    %v365 = vsel %vm288, %v52, 0
    %v368 = vsel %vm288, %v53, 0
    %v371 = vsel %vm288, %v54, 0
    %v374 = vsel %vm288, %v55, 0
    %v377 = vsel %vm288, %v56, 0
    %v380 = vsel %vm288, %v57, 0
    %v383 = vsel %vm288, %v58, 0
    %v386 = vsel %vm288, %v59, 0
    %v389 = vsel %vm288, %v60, 0
    %v392 = vsel %vm288, %v61, 0
    %v395 = vsel %vm288, %v62, 0
    %v398 = vsel %vm288, %v63, 0
    %v401 = vsel %vm288, %v64, 0
    %v404 = vsel %vm288, %v65, 0
    %v407 = vsel %vm288, %v66, 0
    %v410 = vsel %vm288, %v67, 0
    %v413 = vsel %vm288, %v68, 0
    %v416 = vsel %vm288, %v69, 0
    %v419 = vsel %vm288, %v70, 0
    %v422 = vsel %vm288, %v71, 0
    %v425 = vsel %vm288, %v72, 0
    %v428 = vsel %vm288, %v73, 0
    %v431 = vsel %vm288, %v74, 0
    %v434 = vsel %vm288, %v75, 0
    %v437 = vsel %vm288, %v76, 0
    %v440 = vsel %vm288, %v77, 0
    %v443 = vsel %vm288, %v78, 0
    %v446 = vsel %vm288, %v79, 0
    %v449 = vsel %vm288, %v80, 0
    %v452 = vsel %vm288, %v81, 0
    %v455 = vsel %vm288, %v82, 0
    %v458 = vsel %vm288, %v83, 0
    %v461 = vsel %vm288, %v84, 0
    %v464 = vsel %vm288, %v85, 0
    %v467 = vsel %vm288, %v86, 0
    %v470 = vsel %vm288, %v87, 0
    %v473 = vsel %vm288, %v88, 0
    %v476 = vsel %vm288, %v89, 0
    %v479 = vsel %vm288, %v90, 0
    %v482 = vsel %vm288, %v91, 0
    %v485 = vsel %vm288, %v92, 0
    %v488 = vsel %vm288, %v93, 0
    %v491 = vsel %vm288, %v94, 0
    %v494 = vsel %vm288, %v95, 0
    %v497 = vsel %vm288, %v96, 0
    %v500 = vsel %vm288, %v97, 0
    %v503 = vsel %vm288, %v98, 0
    %v506 = vsel %vm288, %v99, 0
    %v509 = vsel %vm288, %v100, 0
    %v512 = vsel %vm288, %v101, 0
    %v515 = vsel %vm288, %v102, 0
    %v518 = vsel %vm288, %v103, 0
    %v521 = vsel %vm288, %v104, 0
    %v524 = vsel %vm288, %v105, 0
    %v527 = vsel %vm288, %v106, 0
    %v530 = vsel %vm288, %v107, 0
    %v533 = vsel %vm288, %v108, 0
    %v536 = vsel %vm288, %v109, 0
    %v539 = vsel %vm288, %v110, 0
    %v542 = vsel %vm288, %v111, 0
    %v545 = vsel %vm288, %v112, 0
    %v548 = vsel %vm288, %v113, 0
    %v551 = vsel %vm288, %v114, 0
    %v554 = vsel %vm288, %v115, 0
    %v557 = vsel %vm288, %v116, 0
    %v560 = vsel %vm288, %v117, 0
    %v563 = vsel %vm288, %v118, 0
    %v566 = vsel %vm288, %v119, 0
    %v569 = vsel %vm288, %v120, 0
    %v572 = vsel %vm288, %v121, 0
    %v575 = vsel %vm288, %v122, 0
    %v578 = vsel %vm288, %v123, 0
    %v581 = vsel %vm288, %v124, 0
    %v584 = vsel %vm288, %v125, 0
    %v587 = vsel %vm288, %v126, 0
    %v590 = vsel %vm288, %v127, 0
    %v593 = vsel %vm288, %v128, 0
    %v596 = vsel %vm288, %v129, 0
    %v599 = vsel %vm288, %v130, 0
    %v602 = vsel %vm288, %v131, 0
    %v605 = vsel %vm288, %v132, 0
    %v608 = vsel %vm288, %v133, 0
    %v611 = vsel %vm288, %v134, 0
    %v614 = vsel %vm288, %v135, 0
    %v617 = vsel %vm288, %v136, 0
    %v620 = vsel %vm288, %v137, 0
    %v623 = vsel %vm288, %v138, 0
    %v626 = vsel %vm288, %v139, 0
    %v629 = vsel %vm288, %v140, 0
    %v632 = vsel %vm288, %v141, 0
    %v635 = vsel %vm288, %v142, 0
    %v638 = vsel %vm288, %v143, 0
    %v641 = vsel %vm288, %v144, 0
    %v644 = vsel %vm288, %v145, 0
    %v647 = vsel %vm288, %v146, 0
    %v650 = vsel %vm288, %v147, 0
    %v653 = vsel %vm288, %v148, 0
    %v656 = vsel %vm288, %v149, 0
    %v659 = vsel %vm288, %v150, 0
    %v662 = vsel %vm288, %v151, 0
    %v665 = vsel %vm288, %v152, 0
    %v668 = vsel %vm288, %v153, 0
    %v671 = vsel %vm288, %v154, 0
    %v674 = vsel %vm288, %v155, 0
    %v677 = vsel %vm288, %v156, 0
    %v680 = vsel %vm288, %v157, 0
    %v683 = vsel %vm288, %v158, 0
    %v686 = vsel %vm288, %v159, 0
    %v689 = vsel %vm288, %v160, 0
    %v692 = vsel %vm288, %v161, 0
    %v695 = vsel %vm288, %v162, 0
    %v698 = vsel %vm288, %v163, 0
    %v701 = vsel %vm288, %v164, 0
    %v704 = vsel %vm288, %v165, 0
    %v707 = vsel %vm288, %v166, 0
    %v710 = vsel %vm288, %v167, 0
    %v713 = vsel %vm288, %v168, 0
    %v716 = vsel %vm288, %v169, 0
    %v719 = vsel %vm288, %v170, 0
    %v722 = vsel %vm288, %v171, 0
    %v725 = vsel %vm288, %v172, 0
    %v728 = vsel %vm288, %v173, 0
    %v731 = vsel %vm288, %v174, 0
    %v734 = vsel %vm288, %v175, 0
    %v737 = vsel %vm288, %v176, 0
    %v740 = vsel %vm288, %v177, 0
    %v743 = vsel %vm288, %v178, 0
    %v746 = vsel %vm288, %v179, 0
    %v749 = vsel %vm288, %v180, 0
    %v752 = vsel %vm288, %v181, 0
    %v755 = vsel %vm288, %v182, 0
    %v758 = vsel %vm288, %v183, 0
    %v761 = vsel %vm288, %v184, 0
    %v764 = vsel %vm288, %v185, 0
    %v767 = vsel %vm288, %v186, 0
    %v770 = vsel %vm288, %v187, 0
    %v773 = vsel %vm288, %v188, 0
    %v776 = vsel %vm288, %v189, 0
    %v779 = vsel %vm288, %v190, 0
    %v782 = vsel %vm288, %v191, 0
    %v785 = vsel %vm288, %v192, 0
    %v788 = vsel %vm288, %v193, 0
    %v791 = vsel %vm288, %v194, 0
    %v794 = vsel %vm288, %v195, 0
    %v797 = vsel %vm288, %v196, 0
    %v800 = vsel %vm288, %v197, 0
    %v803 = vsel %vm288, %v198, 0
    %v806 = vsel %vm288, %v199, 0
    %v809 = vsel %vm288, %v200, 0
    %v812 = vsel %vm288, %v201, 0
    %v815 = vsel %vm288, %v202, 0
    %v818 = vsel %vm288, %v203, 0
    %v821 = vsel %vm288, %v204, 0
    %v824 = vsel %vm288, %v205, 0
    %v827 = vsel %vm288, %v206, 0
    %v830 = vsel %vm288, %v207, 0
    %v833 = vsel %vm288, %v208, 0
    %v836 = vsel %vm288, %v209, 0
    %v839 = vsel %vm288, %v210, 0
    %v842 = vsel %vm288, %v211, 0
    %v845 = vsel %vm288, %v212, 0
    %v848 = vsel %vm288, %v213, 0
    %v851 = vsel %vm288, %v214, 0
    %v854 = vsel %vm288, %v215, 0
    %v857 = vsel %vm288, %v216, 0
    %v860 = vsel %vm288, %v217, 0
    %v863 = vsel %vm288, %v218, 0
    %v866 = vsel %vm288, %v219, 0
    %v869 = vsel %vm288, %v220, 0
    %v872 = vsel %vm288, %v221, 0
    %v875 = vsel %vm288, %v222, 0
    %v878 = vsel %vm288, %v223, 0
    %v881 = vsel %vm288, %v224, 0
    %v884 = vsel %vm288, %v225, 0
    %v887 = vsel %vm288, %v226, 0
    %v890 = vsel %vm288, %v227, 0
    %v893 = vsel %vm288, %v228, 0
    %v896 = vsel %vm288, %v229, 0
    %v899 = vsel %vm288, %v230, 0
    %v902 = vsel %vm288, %v231, 0
    %v905 = vsel %vm288, %v232, 0
    %v908 = vsel %vm288, %v233, 0
    %v911 = vsel %vm288, %v234, 0
    %v914 = vsel %vm288, %v235, 0
    %v917 = vsel %vm288, %v236, 0
    %v920 = vsel %vm288, %v237, 0
    %v923 = vsel %vm288, %v238, 0
    %v926 = vsel %vm288, %v239, 0
    %v929 = vsel %vm288, %v240, 0
    %v932 = vsel %vm288, %v241, 0
    %v935 = vsel %vm288, %v242, 0
    %v938 = vsel %vm288, %v243, 0
    %v941 = vsel %vm288, %v244, 0
    %v944 = vsel %vm288, %v245, 0
    %v947 = vsel %vm288, %v246, 0
    %v950 = vsel %vm288, %v247, 0
    %v953 = vsel %vm288, %v248, 0
    %v956 = vsel %vm288, %v249, 0
    %v959 = vsel %vm288, %v250, 0
    %v962 = vsel %vm288, %v251, 0
    %v965 = vsel %vm288, %v252, 0
    %v968 = vsel %vm288, %v253, 0
    %v971 = vsel %vm288, %v254, 0
    %v974 = vsel %vm288, %v255, 0
    %v977 = vsel %vm288, %v256, 0
    %v980 = vsel %vm288, %v257, 0
    %v983 = vsel %vm288, %v258, 0
    %v986 = vsel %vm288, %v259, 0
    %v989 = vsel %vm288, %v260, 0
    %v992 = vsel %vm288, %v261, 0
    %v995 = vsel %vm288, %v262, 0
    %v998 = vsel %vm288, %v263, 0
    %v1001 = vsel %vm288, %v264, 0
    %v1004 = vsel %vm288, %v265, 0
    %v1007 = vsel %vm288, %v266, 0
    %v1010 = vsel %vm288, %v267, 0
    %v1013 = vsel %vm288, %v268, 0
    %v1016 = vsel %vm288, %v269, 0
    %v1019 = vsel %vm288, %v270, 0
    %v1022 = vsel %vm288, %v271, 0
    %v1025 = vsel %vm288, %v272, 0
    %v1028 = vsel %vm288, %v273, 0
    %v1031 = vsel %vm288, %v274, 0
    %v1034 = vsel %vm288, %v275, 0
    %v1037 = vsel %vm288, %v276, 0
    %v1040 = vsel %vm288, %v277, 0
    %v1043 = vsel %vm288, %v278, 0
    %v1046 = vsel %vm288, %v279, 0
    %v1049 = vsel %vm288, %v280, 0
    %v1052 = vsel %vm288, %v281, 0
    %v1055 = vsel %vm288, %v282, 0
    %vm1057 = vcmask 1043456
    %v1059 = vsel %vm1057, %v287, 0
    %1061 = vmatpush.msra.mxu0 0.0
    %1062 = vmatpush.msra.mxu0 0.0
    %1063 = vmatpush.msra.mxu0 0.0
    %1064 = vmatpush.msra.mxu0 0.0
    %1065 = vmatpush.msra.mxu0 0.0
    %1066 = vmatpush.msra.mxu0 0.0
    %1067 = vmatpush.msra.mxu0 0.0
    %1068 = vmatpush.msra.mxu0 0.0
    %1069 = vmatpush.msra.mxu0 0.0
    %1070 = vmatpush.msra.mxu0 0.0
    %1071 = vmatpush.msra.mxu0 0.0
    %1072 = vmatpush.msra.mxu0 %v1059
    %1073 = vmatpush.msra.mxu0 %v286
    %1074 = vmatpush.msra.mxu0 %v285
    %1075 = vmatpush.msra.mxu0 %v284
    %1076 = vmatpush.msra.mxu0 %v283
    %1077 = vmatmul.f32.gmra.mxu0 %v290
    %v1078 = vpop.f32.mrf.mxu0
    %v1079 = vadd.f32 0.0, %v1078
    %1080 = vmatmul.f32.gmra.mxu0 %v293
    %v1081 = vpop.f32.mrf.mxu0
    %v1082 = vadd.f32 0.0, %v1081
    %1083 = vmatmul.f32.gmra.mxu0 %v296
    %v1084 = vpop.f32.mrf.mxu0
    %v1085 = vadd.f32 0.0, %v1084
    %1086 = vmatmul.f32.gmra.mxu0 %v299
    %v1087 = vpop.f32.mrf.mxu0
    %v1088 = vadd.f32 0.0, %v1087
    %1089 = vmatmul.f32.gmra.mxu0 %v302
    %v1090 = vpop.f32.mrf.mxu0
    %v1091 = vadd.f32 0.0, %v1090
    %1092 = vmatmul.f32.gmra.mxu0 %v305
    %v1093 = vpop.f32.mrf.mxu0
    %v1094 = vadd.f32 0.0, %v1093
    %1095 = vmatmul.f32.gmra.mxu0 %v308
    %v1096 = vpop.f32.mrf.mxu0
    %v1097 = vadd.f32 0.0, %v1096
    %1098 = vmatmul.f32.gmra.mxu0 %v311
    %v1099 = vpop.f32.mrf.mxu0
    %v1100 = vadd.f32 0.0, %v1099
    %1101 = vmatmul.f32.gmra.mxu0 %v314
    %v1102 = vpop.f32.mrf.mxu0
    %v1103 = vadd.f32 0.0, %v1102
    %1104 = vmatmul.f32.gmra.mxu0 %v317
    %v1105 = vpop.f32.mrf.mxu0
    %v1106 = vadd.f32 0.0, %v1105
    %1107 = vmatmul.f32.gmra.mxu0 %v320
    %v1108 = vpop.f32.mrf.mxu0
    %v1109 = vadd.f32 0.0, %v1108
    %1110 = vmatmul.f32.gmra.mxu0 %v323
    %v1111 = vpop.f32.mrf.mxu0
    %v1112 = vadd.f32 0.0, %v1111
    %1113 = vmatmul.f32.gmra.mxu0 %v326
    %v1114 = vpop.f32.mrf.mxu0
    %v1115 = vadd.f32 0.0, %v1114
    %1116 = vmatmul.f32.gmra.mxu0 %v329
    %v1117 = vpop.f32.mrf.mxu0
    %v1118 = vadd.f32 0.0, %v1117
    %1119 = vmatmul.f32.gmra.mxu0 %v332
    %v1120 = vpop.f32.mrf.mxu0
    %v1121 = vadd.f32 0.0, %v1120
    %1122 = vmatmul.f32.gmra.mxu0 %v335
    %v1123 = vpop.f32.mrf.mxu0
    %v1124 = vadd.f32 0.0, %v1123
    %1125 = vmatmul.f32.gmra.mxu0 %v338
    %v1126 = vpop.f32.mrf.mxu0
    %v1127 = vadd.f32 0.0, %v1126
    %1128 = vmatmul.f32.gmra.mxu0 %v341
    %v1129 = vpop.f32.mrf.mxu0
    %v1130 = vadd.f32 0.0, %v1129
    %1131 = vmatmul.f32.gmra.mxu0 %v344
    %v1132 = vpop.f32.mrf.mxu0
    %v1133 = vadd.f32 0.0, %v1132
    %1134 = vmatmul.f32.gmra.mxu0 %v347
    %v1135 = vpop.f32.mrf.mxu0
    %v1136 = vadd.f32 0.0, %v1135
    %1137 = vmatmul.f32.gmra.mxu0 %v350
    %v1138 = vpop.f32.mrf.mxu0
    %v1139 = vadd.f32 0.0, %v1138
    %1140 = vmatmul.f32.gmra.mxu0 %v353
    %v1141 = vpop.f32.mrf.mxu0
    %v1142 = vadd.f32 0.0, %v1141
    %1143 = vmatmul.f32.gmra.mxu0 %v356
    %v1144 = vpop.f32.mrf.mxu0
    %v1145 = vadd.f32 0.0, %v1144
    %1146 = vmatmul.f32.gmra.mxu0 %v359
    %v1147 = vpop.f32.mrf.mxu0
    %v1148 = vadd.f32 0.0, %v1147
    %1149 = vmatmul.f32.gmra.mxu0 %v362
    %v1150 = vpop.f32.mrf.mxu0
    %v1151 = vadd.f32 0.0, %v1150
    %1152 = vmatmul.f32.gmra.mxu0 %v365
    %v1153 = vpop.f32.mrf.mxu0
    %v1154 = vadd.f32 0.0, %v1153
    %1155 = vmatmul.f32.gmra.mxu0 %v368
    %v1156 = vpop.f32.mrf.mxu0
    %v1157 = vadd.f32 0.0, %v1156
    %1158 = vmatmul.f32.gmra.mxu0 %v371
    %v1159 = vpop.f32.mrf.mxu0
    %v1160 = vadd.f32 0.0, %v1159
    %1161 = vmatmul.f32.gmra.mxu0 %v374
    %v1162 = vpop.f32.mrf.mxu0
    %v1163 = vadd.f32 0.0, %v1162
    %1164 = vmatmul.f32.gmra.mxu0 %v377
    %v1165 = vpop.f32.mrf.mxu0
    %v1166 = vadd.f32 0.0, %v1165
    %1167 = vmatmul.f32.gmra.mxu0 %v380
    %v1168 = vpop.f32.mrf.mxu0
    %v1169 = vadd.f32 0.0, %v1168
    %1170 = vmatmul.f32.gmra.mxu0 %v383
    %v1171 = vpop.f32.mrf.mxu0
    %v1172 = vadd.f32 0.0, %v1171
    %1173 = vmatmul.f32.gmra.mxu0 %v386
    %v1174 = vpop.f32.mrf.mxu0
    %v1175 = vadd.f32 0.0, %v1174
    %1176 = vmatmul.f32.gmra.mxu0 %v389
    %v1177 = vpop.f32.mrf.mxu0
    %v1178 = vadd.f32 0.0, %v1177
    %1179 = vmatmul.f32.gmra.mxu0 %v392
    %v1180 = vpop.f32.mrf.mxu0
    %v1181 = vadd.f32 0.0, %v1180
    %1182 = vmatmul.f32.gmra.mxu0 %v395
    %v1183 = vpop.f32.mrf.mxu0
    %v1184 = vadd.f32 0.0, %v1183
    %1185 = vmatmul.f32.gmra.mxu0 %v398
    %v1186 = vpop.f32.mrf.mxu0
    %v1187 = vadd.f32 0.0, %v1186
    %1188 = vmatmul.f32.gmra.mxu0 %v401
    %v1189 = vpop.f32.mrf.mxu0
    %v1190 = vadd.f32 0.0, %v1189
    %1191 = vmatmul.f32.gmra.mxu0 %v404
    %v1192 = vpop.f32.mrf.mxu0
    %v1193 = vadd.f32 0.0, %v1192
    %1194 = vmatmul.f32.gmra.mxu0 %v407
    %v1195 = vpop.f32.mrf.mxu0
    %v1196 = vadd.f32 0.0, %v1195
    %1197 = vmatmul.f32.gmra.mxu0 %v410
    %v1198 = vpop.f32.mrf.mxu0
    %v1199 = vadd.f32 0.0, %v1198
    %1200 = vmatmul.f32.gmra.mxu0 %v413
    %v1201 = vpop.f32.mrf.mxu0
    %v1202 = vadd.f32 0.0, %v1201
    %1203 = vmatmul.f32.gmra.mxu0 %v416
    %v1204 = vpop.f32.mrf.mxu0
    %v1205 = vadd.f32 0.0, %v1204
    %1206 = vmatmul.f32.gmra.mxu0 %v419
    %v1207 = vpop.f32.mrf.mxu0
    %v1208 = vadd.f32 0.0, %v1207
    %1209 = vmatmul.f32.gmra.mxu0 %v422
    %v1210 = vpop.f32.mrf.mxu0
    %v1211 = vadd.f32 0.0, %v1210
    %1212 = vmatmul.f32.gmra.mxu0 %v425
    %v1213 = vpop.f32.mrf.mxu0
    %v1214 = vadd.f32 0.0, %v1213
    %1215 = vmatmul.f32.gmra.mxu0 %v428
    %v1216 = vpop.f32.mrf.mxu0
    %v1217 = vadd.f32 0.0, %v1216
    %1218 = vmatmul.f32.gmra.mxu0 %v431
    %v1219 = vpop.f32.mrf.mxu0
    %v1220 = vadd.f32 0.0, %v1219
    %1221 = vmatmul.f32.gmra.mxu0 %v434
    %v1222 = vpop.f32.mrf.mxu0
    %v1223 = vadd.f32 0.0, %v1222
    %1224 = vmatmul.f32.gmra.mxu0 %v437
    %v1225 = vpop.f32.mrf.mxu0
    %v1226 = vadd.f32 0.0, %v1225
    %1227 = vmatmul.f32.gmra.mxu0 %v440
    %v1228 = vpop.f32.mrf.mxu0
    %v1229 = vadd.f32 0.0, %v1228
    %1230 = vmatmul.f32.gmra.mxu0 %v443
    %v1231 = vpop.f32.mrf.mxu0
    %v1232 = vadd.f32 0.0, %v1231
    %1233 = vmatmul.f32.gmra.mxu0 %v446
    %v1234 = vpop.f32.mrf.mxu0
    %v1235 = vadd.f32 0.0, %v1234
    %1236 = vmatmul.f32.gmra.mxu0 %v449
    %v1237 = vpop.f32.mrf.mxu0
    %v1238 = vadd.f32 0.0, %v1237
    %1239 = vmatmul.f32.gmra.mxu0 %v452
    %v1240 = vpop.f32.mrf.mxu0
    %v1241 = vadd.f32 0.0, %v1240
    %1242 = vmatmul.f32.gmra.mxu0 %v455
    %v1243 = vpop.f32.mrf.mxu0
    %v1244 = vadd.f32 0.0, %v1243
    %1245 = vmatmul.f32.gmra.mxu0 %v458
    %v1246 = vpop.f32.mrf.mxu0
    %v1247 = vadd.f32 0.0, %v1246
    %1248 = vmatmul.f32.gmra.mxu0 %v461
    %v1249 = vpop.f32.mrf.mxu0
    %v1250 = vadd.f32 0.0, %v1249
    %1251 = vmatmul.f32.gmra.mxu0 %v464
    %v1252 = vpop.f32.mrf.mxu0
    %v1253 = vadd.f32 0.0, %v1252
    %1254 = vmatmul.f32.gmra.mxu0 %v467
    %v1255 = vpop.f32.mrf.mxu0
    %v1256 = vadd.f32 0.0, %v1255
    %1257 = vmatmul.f32.gmra.mxu0 %v470
    %v1258 = vpop.f32.mrf.mxu0
    %v1259 = vadd.f32 0.0, %v1258
    %1260 = vmatmul.f32.gmra.mxu0 %v473
    %v1261 = vpop.f32.mrf.mxu0
    %v1262 = vadd.f32 0.0, %v1261
    %1263 = vmatmul.f32.gmra.mxu0 %v476
    %v1264 = vpop.f32.mrf.mxu0
    %v1265 = vadd.f32 0.0, %v1264
    %1266 = vmatmul.f32.gmra.mxu0 %v479
    %v1267 = vpop.f32.mrf.mxu0
    %v1268 = vadd.f32 0.0, %v1267
    %1269 = vmatmul.f32.gmra.mxu0 %v482
    %v1270 = vpop.f32.mrf.mxu0
    %v1271 = vadd.f32 0.0, %v1270
    %1272 = vmatmul.f32.gmra.mxu0 %v485
    %v1273 = vpop.f32.mrf.mxu0
    %v1274 = vadd.f32 0.0, %v1273
    %1275 = vmatmul.f32.gmra.mxu0 %v488
    %v1276 = vpop.f32.mrf.mxu0
    %v1277 = vadd.f32 0.0, %v1276
    %1278 = vmatmul.f32.gmra.mxu0 %v491
    %v1279 = vpop.f32.mrf.mxu0
    %v1280 = vadd.f32 0.0, %v1279
    %1281 = vmatmul.f32.gmra.mxu0 %v494
    %v1282 = vpop.f32.mrf.mxu0
    %v1283 = vadd.f32 0.0, %v1282
    %1284 = vmatmul.f32.gmra.mxu0 %v497
    %v1285 = vpop.f32.mrf.mxu0
    %v1286 = vadd.f32 0.0, %v1285
    %1287 = vmatmul.f32.gmra.mxu0 %v500
    %v1288 = vpop.f32.mrf.mxu0
    %v1289 = vadd.f32 0.0, %v1288
    %1290 = vmatmul.f32.gmra.mxu0 %v503
    %v1291 = vpop.f32.mrf.mxu0
    %v1292 = vadd.f32 0.0, %v1291
    %1293 = vmatmul.f32.gmra.mxu0 %v506
    %v1294 = vpop.f32.mrf.mxu0
    %v1295 = vadd.f32 0.0, %v1294
    %1296 = vmatmul.f32.gmra.mxu0 %v509
    %v1297 = vpop.f32.mrf.mxu0
    %v1298 = vadd.f32 0.0, %v1297
    %1299 = vmatmul.f32.gmra.mxu0 %v512
    %v1300 = vpop.f32.mrf.mxu0
    %v1301 = vadd.f32 0.0, %v1300
    %1302 = vmatmul.f32.gmra.mxu0 %v515
    %v1303 = vpop.f32.mrf.mxu0
    %v1304 = vadd.f32 0.0, %v1303
    %1305 = vmatmul.f32.gmra.mxu0 %v518
    %v1306 = vpop.f32.mrf.mxu0
    %v1307 = vadd.f32 0.0, %v1306
    %1308 = vmatmul.f32.gmra.mxu0 %v521
    %v1309 = vpop.f32.mrf.mxu0
    %v1310 = vadd.f32 0.0, %v1309
    %1311 = vmatmul.f32.gmra.mxu0 %v524
    %v1312 = vpop.f32.mrf.mxu0
    %v1313 = vadd.f32 0.0, %v1312
    %1314 = vmatmul.f32.gmra.mxu0 %v527
    %v1315 = vpop.f32.mrf.mxu0
    %v1316 = vadd.f32 0.0, %v1315
    %1317 = vmatmul.f32.gmra.mxu0 %v530
    %v1318 = vpop.f32.mrf.mxu0
    %v1319 = vadd.f32 0.0, %v1318
    %1320 = vmatmul.f32.gmra.mxu0 %v533
    %v1321 = vpop.f32.mrf.mxu0
    %v1322 = vadd.f32 0.0, %v1321
    %1323 = vmatmul.f32.gmra.mxu0 %v536
    %v1324 = vpop.f32.mrf.mxu0
    %v1325 = vadd.f32 0.0, %v1324
    %1326 = vmatmul.f32.gmra.mxu0 %v539
    %v1327 = vpop.f32.mrf.mxu0
    %v1328 = vadd.f32 0.0, %v1327
    %1329 = vmatmul.f32.gmra.mxu0 %v542
    %v1330 = vpop.f32.mrf.mxu0
    %v1331 = vadd.f32 0.0, %v1330
    %1332 = vmatmul.f32.gmra.mxu0 %v545
    %v1333 = vpop.f32.mrf.mxu0
    %v1334 = vadd.f32 0.0, %v1333
    %1335 = vmatmul.f32.gmra.mxu0 %v548
    %v1336 = vpop.f32.mrf.mxu0
    %v1337 = vadd.f32 0.0, %v1336
    %1338 = vmatmul.f32.gmra.mxu0 %v551
    %v1339 = vpop.f32.mrf.mxu0
    %v1340 = vadd.f32 0.0, %v1339
    %1341 = vmatmul.f32.gmra.mxu0 %v554
    %v1342 = vpop.f32.mrf.mxu0
    %v1343 = vadd.f32 0.0, %v1342
    %1344 = vmatmul.f32.gmra.mxu0 %v557
    %v1345 = vpop.f32.mrf.mxu0
    %v1346 = vadd.f32 0.0, %v1345
    %1347 = vmatmul.f32.gmra.mxu0 %v560
    %v1348 = vpop.f32.mrf.mxu0
    %v1349 = vadd.f32 0.0, %v1348
    %1350 = vmatmul.f32.gmra.mxu0 %v563
    %v1351 = vpop.f32.mrf.mxu0
    %v1352 = vadd.f32 0.0, %v1351
    %1353 = vmatmul.f32.gmra.mxu0 %v566
    %v1354 = vpop.f32.mrf.mxu0
    %v1355 = vadd.f32 0.0, %v1354
    %1356 = vmatmul.f32.gmra.mxu0 %v569
    %v1357 = vpop.f32.mrf.mxu0
    %v1358 = vadd.f32 0.0, %v1357
    %1359 = vmatmul.f32.gmra.mxu0 %v572
    %v1360 = vpop.f32.mrf.mxu0
    %v1361 = vadd.f32 0.0, %v1360
    %1362 = vmatmul.f32.gmra.mxu0 %v575
    %v1363 = vpop.f32.mrf.mxu0
    %v1364 = vadd.f32 0.0, %v1363
    %1365 = vmatmul.f32.gmra.mxu0 %v578
    %v1366 = vpop.f32.mrf.mxu0
    %v1367 = vadd.f32 0.0, %v1366
    %1368 = vmatmul.f32.gmra.mxu0 %v581
    %v1369 = vpop.f32.mrf.mxu0
    %v1370 = vadd.f32 0.0, %v1369
    %1371 = vmatmul.f32.gmra.mxu0 %v584
    %v1372 = vpop.f32.mrf.mxu0
    %v1373 = vadd.f32 0.0, %v1372
    %1374 = vmatmul.f32.gmra.mxu0 %v587
    %v1375 = vpop.f32.mrf.mxu0
    %v1376 = vadd.f32 0.0, %v1375
    %1377 = vmatmul.f32.gmra.mxu0 %v590
    %v1378 = vpop.f32.mrf.mxu0
    %v1379 = vadd.f32 0.0, %v1378
    %1380 = vmatmul.f32.gmra.mxu0 %v593
    %v1381 = vpop.f32.mrf.mxu0
    %v1382 = vadd.f32 0.0, %v1381
    %1383 = vmatmul.f32.gmra.mxu0 %v596
    %v1384 = vpop.f32.mrf.mxu0
    %v1385 = vadd.f32 0.0, %v1384
    %1386 = vmatmul.f32.gmra.mxu0 %v599
    %v1387 = vpop.f32.mrf.mxu0
    %v1388 = vadd.f32 0.0, %v1387
    %1389 = vmatmul.f32.gmra.mxu0 %v602
    %v1390 = vpop.f32.mrf.mxu0
    %v1391 = vadd.f32 0.0, %v1390
    %1392 = vmatmul.f32.gmra.mxu0 %v605
    %v1393 = vpop.f32.mrf.mxu0
    %v1394 = vadd.f32 0.0, %v1393
    %1395 = vmatmul.f32.gmra.mxu0 %v608
    %v1396 = vpop.f32.mrf.mxu0
    %v1397 = vadd.f32 0.0, %v1396
    %1398 = vmatmul.f32.gmra.mxu0 %v611
    %v1399 = vpop.f32.mrf.mxu0
    %v1400 = vadd.f32 0.0, %v1399
    %1401 = vmatmul.f32.gmra.mxu0 %v614
    %v1402 = vpop.f32.mrf.mxu0
    %v1403 = vadd.f32 0.0, %v1402
    %1404 = vmatmul.f32.gmra.mxu0 %v617
    %v1405 = vpop.f32.mrf.mxu0
    %v1406 = vadd.f32 0.0, %v1405
    %1407 = vmatmul.f32.gmra.mxu0 %v620
    %v1408 = vpop.f32.mrf.mxu0
    %v1409 = vadd.f32 0.0, %v1408
    %1410 = vmatmul.f32.gmra.mxu0 %v623
    %v1411 = vpop.f32.mrf.mxu0
    %v1412 = vadd.f32 0.0, %v1411
    %1413 = vmatmul.f32.gmra.mxu0 %v626
    %v1414 = vpop.f32.mrf.mxu0
    %v1415 = vadd.f32 0.0, %v1414
    %1416 = vmatmul.f32.gmra.mxu0 %v629
    %v1417 = vpop.f32.mrf.mxu0
    %v1418 = vadd.f32 0.0, %v1417
    %1419 = vmatmul.f32.gmra.mxu0 %v632
    %v1420 = vpop.f32.mrf.mxu0
    %v1421 = vadd.f32 0.0, %v1420
    %1422 = vmatmul.f32.gmra.mxu0 %v635
    %v1423 = vpop.f32.mrf.mxu0
    %v1424 = vadd.f32 0.0, %v1423
    %1425 = vmatmul.f32.gmra.mxu0 %v638
    %v1426 = vpop.f32.mrf.mxu0
    %v1427 = vadd.f32 0.0, %v1426
    %1428 = vmatmul.f32.gmra.mxu0 %v641
    %v1429 = vpop.f32.mrf.mxu0
    %v1430 = vadd.f32 0.0, %v1429
    %1431 = vmatmul.f32.gmra.mxu0 %v644
    %v1432 = vpop.f32.mrf.mxu0
    %v1433 = vadd.f32 0.0, %v1432
    %1434 = vmatmul.f32.gmra.mxu0 %v647
    %v1435 = vpop.f32.mrf.mxu0
    %v1436 = vadd.f32 0.0, %v1435
    %1437 = vmatmul.f32.gmra.mxu0 %v650
    %v1438 = vpop.f32.mrf.mxu0
    %v1439 = vadd.f32 0.0, %v1438
    %1440 = vmatmul.f32.gmra.mxu0 %v653
    %v1441 = vpop.f32.mrf.mxu0
    %v1442 = vadd.f32 0.0, %v1441
    %1443 = vmatmul.f32.gmra.mxu0 %v656
    %v1444 = vpop.f32.mrf.mxu0
    %v1445 = vadd.f32 0.0, %v1444
    %1446 = vmatmul.f32.gmra.mxu0 %v659
    %v1447 = vpop.f32.mrf.mxu0
    %v1448 = vadd.f32 0.0, %v1447
    %1449 = vmatmul.f32.gmra.mxu0 %v662
    %v1450 = vpop.f32.mrf.mxu0
    %v1451 = vadd.f32 0.0, %v1450
    %1452 = vmatmul.f32.gmra.mxu0 %v665
    %v1453 = vpop.f32.mrf.mxu0
    %v1454 = vadd.f32 0.0, %v1453
    %1455 = vmatmul.f32.gmra.mxu0 %v668
    %v1456 = vpop.f32.mrf.mxu0
    %v1457 = vadd.f32 0.0, %v1456
    %1458 = vmatmul.f32.gmra.mxu0 %v671
    %v1459 = vpop.f32.mrf.mxu0
    %v1460 = vadd.f32 0.0, %v1459
    %1461 = vmatmul.f32.gmra.mxu0 %v674
    %v1462 = vpop.f32.mrf.mxu0
    %v1463 = vadd.f32 0.0, %v1462
    %1464 = vmatmul.f32.gmra.mxu0 %v677
    %v1465 = vpop.f32.mrf.mxu0
    %v1466 = vadd.f32 0.0, %v1465
    %1467 = vmatmul.f32.gmra.mxu0 %v680
    %v1468 = vpop.f32.mrf.mxu0
    %v1469 = vadd.f32 0.0, %v1468
    %1470 = vmatmul.f32.gmra.mxu0 %v683
    %v1471 = vpop.f32.mrf.mxu0
    %v1472 = vadd.f32 0.0, %v1471
    %1473 = vmatmul.f32.gmra.mxu0 %v686
    %v1474 = vpop.f32.mrf.mxu0
    %v1475 = vadd.f32 0.0, %v1474
    %1476 = vmatmul.f32.gmra.mxu0 %v689
    %v1477 = vpop.f32.mrf.mxu0
    %v1478 = vadd.f32 0.0, %v1477
    %1479 = vmatmul.f32.gmra.mxu0 %v692
    %v1480 = vpop.f32.mrf.mxu0
    %v1481 = vadd.f32 0.0, %v1480
    %1482 = vmatmul.f32.gmra.mxu0 %v695
    %v1483 = vpop.f32.mrf.mxu0
    %v1484 = vadd.f32 0.0, %v1483
    %1485 = vmatmul.f32.gmra.mxu0 %v698
    %v1486 = vpop.f32.mrf.mxu0
    %v1487 = vadd.f32 0.0, %v1486
    %1488 = vmatmul.f32.gmra.mxu0 %v701
    %v1489 = vpop.f32.mrf.mxu0
    %v1490 = vadd.f32 0.0, %v1489
    %1491 = vmatmul.f32.gmra.mxu0 %v704
    %v1492 = vpop.f32.mrf.mxu0
    %v1493 = vadd.f32 0.0, %v1492
    %1494 = vmatmul.f32.gmra.mxu0 %v707
    %v1495 = vpop.f32.mrf.mxu0
    %v1496 = vadd.f32 0.0, %v1495
    %1497 = vmatmul.f32.gmra.mxu0 %v710
    %v1498 = vpop.f32.mrf.mxu0
    %v1499 = vadd.f32 0.0, %v1498
    %1500 = vmatmul.f32.gmra.mxu0 %v713
    %v1501 = vpop.f32.mrf.mxu0
    %v1502 = vadd.f32 0.0, %v1501
    %1503 = vmatmul.f32.gmra.mxu0 %v716
    %v1504 = vpop.f32.mrf.mxu0
    %v1505 = vadd.f32 0.0, %v1504
    %1506 = vmatmul.f32.gmra.mxu0 %v719
    %v1507 = vpop.f32.mrf.mxu0
    %v1508 = vadd.f32 0.0, %v1507
    %1509 = vmatmul.f32.gmra.mxu0 %v722
    %v1510 = vpop.f32.mrf.mxu0
    %v1511 = vadd.f32 0.0, %v1510
    %1512 = vmatmul.f32.gmra.mxu0 %v725
    %v1513 = vpop.f32.mrf.mxu0
    %v1514 = vadd.f32 0.0, %v1513
    %1515 = vmatmul.f32.gmra.mxu0 %v728
    %v1516 = vpop.f32.mrf.mxu0
    %v1517 = vadd.f32 0.0, %v1516
    %1518 = vmatmul.f32.gmra.mxu0 %v731
    %v1519 = vpop.f32.mrf.mxu0
    %v1520 = vadd.f32 0.0, %v1519
    %1521 = vmatmul.f32.gmra.mxu0 %v734
    %v1522 = vpop.f32.mrf.mxu0
    %v1523 = vadd.f32 0.0, %v1522
    %1524 = vmatmul.f32.gmra.mxu0 %v737
    %v1525 = vpop.f32.mrf.mxu0
    %v1526 = vadd.f32 0.0, %v1525
    %1527 = vmatmul.f32.gmra.mxu0 %v740
    %v1528 = vpop.f32.mrf.mxu0
    %v1529 = vadd.f32 0.0, %v1528
    %1530 = vmatmul.f32.gmra.mxu0 %v743
    %v1531 = vpop.f32.mrf.mxu0
    %v1532 = vadd.f32 0.0, %v1531
    %1533 = vmatmul.f32.gmra.mxu0 %v746
    %v1534 = vpop.f32.mrf.mxu0
    %v1535 = vadd.f32 0.0, %v1534
    %1536 = vmatmul.f32.gmra.mxu0 %v749
    %v1537 = vpop.f32.mrf.mxu0
    %v1538 = vadd.f32 0.0, %v1537
    %1539 = vmatmul.f32.gmra.mxu0 %v752
    %v1540 = vpop.f32.mrf.mxu0
    %v1541 = vadd.f32 0.0, %v1540
    %1542 = vmatmul.f32.gmra.mxu0 %v755
    %v1543 = vpop.f32.mrf.mxu0
    %v1544 = vadd.f32 0.0, %v1543
    %1545 = vmatmul.f32.gmra.mxu0 %v758
    %v1546 = vpop.f32.mrf.mxu0
    %v1547 = vadd.f32 0.0, %v1546
    %1548 = vmatmul.f32.gmra.mxu0 %v761
    %v1549 = vpop.f32.mrf.mxu0
    %v1550 = vadd.f32 0.0, %v1549
    %1551 = vmatmul.f32.gmra.mxu0 %v764
    %v1552 = vpop.f32.mrf.mxu0
    %v1553 = vadd.f32 0.0, %v1552
    %1554 = vmatmul.f32.gmra.mxu0 %v767
    %v1555 = vpop.f32.mrf.mxu0
    %v1556 = vadd.f32 0.0, %v1555
    %1557 = vmatmul.f32.gmra.mxu0 %v770
    %v1558 = vpop.f32.mrf.mxu0
    %v1559 = vadd.f32 0.0, %v1558
    %1560 = vmatmul.f32.gmra.mxu0 %v773
    %v1561 = vpop.f32.mrf.mxu0
    %v1562 = vadd.f32 0.0, %v1561
    %1563 = vmatmul.f32.gmra.mxu0 %v776
    %v1564 = vpop.f32.mrf.mxu0
    %v1565 = vadd.f32 0.0, %v1564
    %1566 = vmatmul.f32.gmra.mxu0 %v779
    %v1567 = vpop.f32.mrf.mxu0
    %v1568 = vadd.f32 0.0, %v1567
    %1569 = vmatmul.f32.gmra.mxu0 %v782
    %v1570 = vpop.f32.mrf.mxu0
    %v1571 = vadd.f32 0.0, %v1570
    %1572 = vmatmul.f32.gmra.mxu0 %v785
    %v1573 = vpop.f32.mrf.mxu0
    %v1574 = vadd.f32 0.0, %v1573
    %1575 = vmatmul.f32.gmra.mxu0 %v788
    %v1576 = vpop.f32.mrf.mxu0
    %v1577 = vadd.f32 0.0, %v1576
    %1578 = vmatmul.f32.gmra.mxu0 %v791
    %v1579 = vpop.f32.mrf.mxu0
    %v1580 = vadd.f32 0.0, %v1579
    %1581 = vmatmul.f32.gmra.mxu0 %v794
    %v1582 = vpop.f32.mrf.mxu0
    %v1583 = vadd.f32 0.0, %v1582
    %1584 = vmatmul.f32.gmra.mxu0 %v797
    %v1585 = vpop.f32.mrf.mxu0
    %v1586 = vadd.f32 0.0, %v1585
    %1587 = vmatmul.f32.gmra.mxu0 %v800
    %v1588 = vpop.f32.mrf.mxu0
    %v1589 = vadd.f32 0.0, %v1588
    %1590 = vmatmul.f32.gmra.mxu0 %v803
    %v1591 = vpop.f32.mrf.mxu0
    %v1592 = vadd.f32 0.0, %v1591
    %1593 = vmatmul.f32.gmra.mxu0 %v806
    %v1594 = vpop.f32.mrf.mxu0
    %v1595 = vadd.f32 0.0, %v1594
    %1596 = vmatmul.f32.gmra.mxu0 %v809
    %v1597 = vpop.f32.mrf.mxu0
    %v1598 = vadd.f32 0.0, %v1597
    %1599 = vmatmul.f32.gmra.mxu0 %v812
    %v1600 = vpop.f32.mrf.mxu0
    %v1601 = vadd.f32 0.0, %v1600
    %1602 = vmatmul.f32.gmra.mxu0 %v815
    %v1603 = vpop.f32.mrf.mxu0
    %v1604 = vadd.f32 0.0, %v1603
    %1605 = vmatmul.f32.gmra.mxu0 %v818
    %v1606 = vpop.f32.mrf.mxu0
    %v1607 = vadd.f32 0.0, %v1606
    %1608 = vmatmul.f32.gmra.mxu0 %v821
    %v1609 = vpop.f32.mrf.mxu0
    %v1610 = vadd.f32 0.0, %v1609
    %1611 = vmatmul.f32.gmra.mxu0 %v824
    %v1612 = vpop.f32.mrf.mxu0
    %v1613 = vadd.f32 0.0, %v1612
    %1614 = vmatmul.f32.gmra.mxu0 %v827
    %v1615 = vpop.f32.mrf.mxu0
    %v1616 = vadd.f32 0.0, %v1615
    %1617 = vmatmul.f32.gmra.mxu0 %v830
    %v1618 = vpop.f32.mrf.mxu0
    %v1619 = vadd.f32 0.0, %v1618
    %1620 = vmatmul.f32.gmra.mxu0 %v833
    %v1621 = vpop.f32.mrf.mxu0
    %v1622 = vadd.f32 0.0, %v1621
    %1623 = vmatmul.f32.gmra.mxu0 %v836
    %v1624 = vpop.f32.mrf.mxu0
    %v1625 = vadd.f32 0.0, %v1624
    %1626 = vmatmul.f32.gmra.mxu0 %v839
    %v1627 = vpop.f32.mrf.mxu0
    %v1628 = vadd.f32 0.0, %v1627
    %1629 = vmatmul.f32.gmra.mxu0 %v842
    %v1630 = vpop.f32.mrf.mxu0
    %v1631 = vadd.f32 0.0, %v1630
    %1632 = vmatmul.f32.gmra.mxu0 %v845
    %v1633 = vpop.f32.mrf.mxu0
    %v1634 = vadd.f32 0.0, %v1633
    %1635 = vmatmul.f32.gmra.mxu0 %v848
    %v1636 = vpop.f32.mrf.mxu0
    %v1637 = vadd.f32 0.0, %v1636
    %1638 = vmatmul.f32.gmra.mxu0 %v851
    %v1639 = vpop.f32.mrf.mxu0
    %v1640 = vadd.f32 0.0, %v1639
    %1641 = vmatmul.f32.gmra.mxu0 %v854
    %v1642 = vpop.f32.mrf.mxu0
    %v1643 = vadd.f32 0.0, %v1642
    %1644 = vmatmul.f32.gmra.mxu0 %v857
    %v1645 = vpop.f32.mrf.mxu0
    %v1646 = vadd.f32 0.0, %v1645
    %1647 = vmatmul.f32.gmra.mxu0 %v860
    %v1648 = vpop.f32.mrf.mxu0
    %v1649 = vadd.f32 0.0, %v1648
    %1650 = vmatmul.f32.gmra.mxu0 %v863
    %v1651 = vpop.f32.mrf.mxu0
    %v1652 = vadd.f32 0.0, %v1651
    %1653 = vmatmul.f32.gmra.mxu0 %v866
    %v1654 = vpop.f32.mrf.mxu0
    %v1655 = vadd.f32 0.0, %v1654
    %1656 = vmatmul.f32.gmra.mxu0 %v869
    %v1657 = vpop.f32.mrf.mxu0
    %v1658 = vadd.f32 0.0, %v1657
    %1659 = vmatmul.f32.gmra.mxu0 %v872
    %v1660 = vpop.f32.mrf.mxu0
    %v1661 = vadd.f32 0.0, %v1660
    %1662 = vmatmul.f32.gmra.mxu0 %v875
    %v1663 = vpop.f32.mrf.mxu0
    %v1664 = vadd.f32 0.0, %v1663
    %1665 = vmatmul.f32.gmra.mxu0 %v878
    %v1666 = vpop.f32.mrf.mxu0
    %v1667 = vadd.f32 0.0, %v1666
    %1668 = vmatmul.f32.gmra.mxu0 %v881
    %v1669 = vpop.f32.mrf.mxu0
    %v1670 = vadd.f32 0.0, %v1669
    %1671 = vmatmul.f32.gmra.mxu0 %v884
    %v1672 = vpop.f32.mrf.mxu0
    %v1673 = vadd.f32 0.0, %v1672
    %1674 = vmatmul.f32.gmra.mxu0 %v887
    %v1675 = vpop.f32.mrf.mxu0
    %v1676 = vadd.f32 0.0, %v1675
    %1677 = vmatmul.f32.gmra.mxu0 %v890
    %v1678 = vpop.f32.mrf.mxu0
    %v1679 = vadd.f32 0.0, %v1678
    %1680 = vmatmul.f32.gmra.mxu0 %v893
    %v1681 = vpop.f32.mrf.mxu0
    %v1682 = vadd.f32 0.0, %v1681
    %1683 = vmatmul.f32.gmra.mxu0 %v896
    %v1684 = vpop.f32.mrf.mxu0
    %v1685 = vadd.f32 0.0, %v1684
    %1686 = vmatmul.f32.gmra.mxu0 %v899
    %v1687 = vpop.f32.mrf.mxu0
    %v1688 = vadd.f32 0.0, %v1687
    %1689 = vmatmul.f32.gmra.mxu0 %v902
    %v1690 = vpop.f32.mrf.mxu0
    %v1691 = vadd.f32 0.0, %v1690
    %1692 = vmatmul.f32.gmra.mxu0 %v905
    %v1693 = vpop.f32.mrf.mxu0
    %v1694 = vadd.f32 0.0, %v1693
    %1695 = vmatmul.f32.gmra.mxu0 %v908
    %v1696 = vpop.f32.mrf.mxu0
    %v1697 = vadd.f32 0.0, %v1696
    %1698 = vmatmul.f32.gmra.mxu0 %v911
    %v1699 = vpop.f32.mrf.mxu0
    %v1700 = vadd.f32 0.0, %v1699
    %1701 = vmatmul.f32.gmra.mxu0 %v914
    %v1702 = vpop.f32.mrf.mxu0
    %v1703 = vadd.f32 0.0, %v1702
    %1704 = vmatmul.f32.gmra.mxu0 %v917
    %v1705 = vpop.f32.mrf.mxu0
    %v1706 = vadd.f32 0.0, %v1705
    %1707 = vmatmul.f32.gmra.mxu0 %v920
    %v1708 = vpop.f32.mrf.mxu0
    %v1709 = vadd.f32 0.0, %v1708
    %1710 = vmatmul.f32.gmra.mxu0 %v923
    %v1711 = vpop.f32.mrf.mxu0
    %v1712 = vadd.f32 0.0, %v1711
    %1713 = vmatmul.f32.gmra.mxu0 %v926
    %v1714 = vpop.f32.mrf.mxu0
    %v1715 = vadd.f32 0.0, %v1714
    %1716 = vmatmul.f32.gmra.mxu0 %v929
    %v1717 = vpop.f32.mrf.mxu0
    %v1718 = vadd.f32 0.0, %v1717
    %1719 = vmatmul.f32.gmra.mxu0 %v932
    %v1720 = vpop.f32.mrf.mxu0
    %v1721 = vadd.f32 0.0, %v1720
    %1722 = vmatmul.f32.gmra.mxu0 %v935
    %v1723 = vpop.f32.mrf.mxu0
    %v1724 = vadd.f32 0.0, %v1723
    %1725 = vmatmul.f32.gmra.mxu0 %v938
    %v1726 = vpop.f32.mrf.mxu0
    %v1727 = vadd.f32 0.0, %v1726
    %1728 = vmatmul.f32.gmra.mxu0 %v941
    %v1729 = vpop.f32.mrf.mxu0
    %v1730 = vadd.f32 0.0, %v1729
    %1731 = vmatmul.f32.gmra.mxu0 %v944
    %v1732 = vpop.f32.mrf.mxu0
    %v1733 = vadd.f32 0.0, %v1732
    %1734 = vmatmul.f32.gmra.mxu0 %v947
    %v1735 = vpop.f32.mrf.mxu0
    %v1736 = vadd.f32 0.0, %v1735
    %1737 = vmatmul.f32.gmra.mxu0 %v950
    %v1738 = vpop.f32.mrf.mxu0
    %v1739 = vadd.f32 0.0, %v1738
    %1740 = vmatmul.f32.gmra.mxu0 %v953
    %v1741 = vpop.f32.mrf.mxu0
    %v1742 = vadd.f32 0.0, %v1741
    %1743 = vmatmul.f32.gmra.mxu0 %v956
    %v1744 = vpop.f32.mrf.mxu0
    %v1745 = vadd.f32 0.0, %v1744
    %1746 = vmatmul.f32.gmra.mxu0 %v959
    %v1747 = vpop.f32.mrf.mxu0
    %v1748 = vadd.f32 0.0, %v1747
    %1749 = vmatmul.f32.gmra.mxu0 %v962
    %v1750 = vpop.f32.mrf.mxu0
    %v1751 = vadd.f32 0.0, %v1750
    %1752 = vmatmul.f32.gmra.mxu0 %v965
    %v1753 = vpop.f32.mrf.mxu0
    %v1754 = vadd.f32 0.0, %v1753
    %1755 = vmatmul.f32.gmra.mxu0 %v968
    %v1756 = vpop.f32.mrf.mxu0
    %v1757 = vadd.f32 0.0, %v1756
    %1758 = vmatmul.f32.gmra.mxu0 %v971
    %v1759 = vpop.f32.mrf.mxu0
    %v1760 = vadd.f32 0.0, %v1759
    %1761 = vmatmul.f32.gmra.mxu0 %v974
    %v1762 = vpop.f32.mrf.mxu0
    %v1763 = vadd.f32 0.0, %v1762
    %1764 = vmatmul.f32.gmra.mxu0 %v977
    %v1765 = vpop.f32.mrf.mxu0
    %v1766 = vadd.f32 0.0, %v1765
    %1767 = vmatmul.f32.gmra.mxu0 %v980
    %v1768 = vpop.f32.mrf.mxu0
    %v1769 = vadd.f32 0.0, %v1768
    %1770 = vmatmul.f32.gmra.mxu0 %v983
    %v1771 = vpop.f32.mrf.mxu0
    %v1772 = vadd.f32 0.0, %v1771
    %1773 = vmatmul.f32.gmra.mxu0 %v986
    %v1774 = vpop.f32.mrf.mxu0
    %v1775 = vadd.f32 0.0, %v1774
    %1776 = vmatmul.f32.gmra.mxu0 %v989
    %v1777 = vpop.f32.mrf.mxu0
    %v1778 = vadd.f32 0.0, %v1777
    %1779 = vmatmul.f32.gmra.mxu0 %v992
    %v1780 = vpop.f32.mrf.mxu0
    %v1781 = vadd.f32 0.0, %v1780
    %1782 = vmatmul.f32.gmra.mxu0 %v995
    %v1783 = vpop.f32.mrf.mxu0
    %v1784 = vadd.f32 0.0, %v1783
    %1785 = vmatmul.f32.gmra.mxu0 %v998
    %v1786 = vpop.f32.mrf.mxu0
    %v1787 = vadd.f32 0.0, %v1786
    %1788 = vmatmul.f32.gmra.mxu0 %v1001
    %v1789 = vpop.f32.mrf.mxu0
    %v1790 = vadd.f32 0.0, %v1789
    %1791 = vmatmul.f32.gmra.mxu0 %v1004
    %v1792 = vpop.f32.mrf.mxu0
    %v1793 = vadd.f32 0.0, %v1792
    %1794 = vmatmul.f32.gmra.mxu0 %v1007
    %v1795 = vpop.f32.mrf.mxu0
    %v1796 = vadd.f32 0.0, %v1795
    %1797 = vmatmul.f32.gmra.mxu0 %v1010
    %v1798 = vpop.f32.mrf.mxu0
    %v1799 = vadd.f32 0.0, %v1798
    %1800 = vmatmul.f32.gmra.mxu0 %v1013
    %v1801 = vpop.f32.mrf.mxu0
    %v1802 = vadd.f32 0.0, %v1801
    %1803 = vmatmul.f32.gmra.mxu0 %v1016
    %v1804 = vpop.f32.mrf.mxu0
    %v1805 = vadd.f32 0.0, %v1804
    %1806 = vmatmul.f32.gmra.mxu0 %v1019
    %v1807 = vpop.f32.mrf.mxu0
    %v1808 = vadd.f32 0.0, %v1807
    %1809 = vmatmul.f32.gmra.mxu0 %v1022
    %v1810 = vpop.f32.mrf.mxu0
    %v1811 = vadd.f32 0.0, %v1810
    %1812 = vmatmul.f32.gmra.mxu0 %v1025
    %v1813 = vpop.f32.mrf.mxu0
    %v1814 = vadd.f32 0.0, %v1813
    %1815 = vmatmul.f32.gmra.mxu0 %v1028
    %v1816 = vpop.f32.mrf.mxu0
    %v1817 = vadd.f32 0.0, %v1816
    %1818 = vmatmul.f32.gmra.mxu0 %v1031
    %v1819 = vpop.f32.mrf.mxu0
    %v1820 = vadd.f32 0.0, %v1819
    %1821 = vmatmul.f32.gmra.mxu0 %v1034
    %v1822 = vpop.f32.mrf.mxu0
    %v1823 = vadd.f32 0.0, %v1822
    %1824 = vmatmul.f32.gmra.mxu0 %v1037
    %v1825 = vpop.f32.mrf.mxu0
    %v1826 = vadd.f32 0.0, %v1825
    %1827 = vmatmul.f32.gmra.mxu0 %v1040
    %v1828 = vpop.f32.mrf.mxu0
    %v1829 = vadd.f32 0.0, %v1828
    %1830 = vmatmul.f32.gmra.mxu0 %v1043
    %v1831 = vpop.f32.mrf.mxu0
    %v1832 = vadd.f32 0.0, %v1831
    %1833 = vmatmul.f32.gmra.mxu0 %v1046
    %v1834 = vpop.f32.mrf.mxu0
    %v1835 = vadd.f32 0.0, %v1834
    %1836 = vmatmul.f32.gmra.mxu0 %v1049
    %v1837 = vpop.f32.mrf.mxu0
    %v1838 = vadd.f32 0.0, %v1837
    %1839 = vmatmul.f32.gmra.mxu0 %v1052
    %v1840 = vpop.f32.mrf.mxu0
    %v1841 = vadd.f32 0.0, %v1840
    %1842 = vmatmul.f32.gmra.mxu0 %v1055
    %v1843 = vpop.f32.mrf.mxu0
    %v1844 = vadd.f32 0.0, %v1843
    %1845 = vdwg.mxu0
    %v1846 = vmax.f32 %v1079, 0.0
    %v1847 = vmax.f32 %v1082, 0.0
    %v1848 = vmax.f32 %v1085, 0.0
    %v1849 = vmax.f32 %v1088, 0.0
    %v1850 = vmax.f32 %v1091, 0.0
    %v1851 = vmax.f32 %v1094, 0.0
    %v1852 = vmax.f32 %v1097, 0.0
    %v1853 = vmax.f32 %v1100, 0.0
    %v1854 = vmax.f32 %v1103, 0.0
    %v1855 = vmax.f32 %v1106, 0.0
    %v1856 = vmax.f32 %v1109, 0.0
    %v1857 = vmax.f32 %v1112, 0.0
    %v1858 = vmax.f32 %v1115, 0.0
    %v1859 = vmax.f32 %v1118, 0.0
    %v1860 = vmax.f32 %v1121, 0.0
    %v1861 = vmax.f32 %v1124, 0.0
    %v1862 = vmax.f32 %v1127, 0.0
    %v1863 = vmax.f32 %v1130, 0.0
    %v1864 = vmax.f32 %v1133, 0.0
    %v1865 = vmax.f32 %v1136, 0.0
    %v1866 = vmax.f32 %v1139, 0.0
    %v1867 = vmax.f32 %v1142, 0.0
    %v1868 = vmax.f32 %v1145, 0.0
    %v1869 = vmax.f32 %v1148, 0.0
    %v1870 = vmax.f32 %v1151, 0.0
    %v1871 = vmax.f32 %v1154, 0.0
    %v1872 = vmax.f32 %v1157, 0.0
    %v1873 = vmax.f32 %v1160, 0.0
    %v1874 = vmax.f32 %v1163, 0.0
    %v1875 = vmax.f32 %v1166, 0.0
    %v1876 = vmax.f32 %v1169, 0.0
    %v1877 = vmax.f32 %v1172, 0.0
    %v1878 = vmax.f32 %v1175, 0.0
    %v1879 = vmax.f32 %v1178, 0.0
    %v1880 = vmax.f32 %v1181, 0.0
    %v1881 = vmax.f32 %v1184, 0.0
    %v1882 = vmax.f32 %v1187, 0.0
    %v1883 = vmax.f32 %v1190, 0.0
    %v1884 = vmax.f32 %v1193, 0.0
    %v1885 = vmax.f32 %v1196, 0.0
    %v1886 = vmax.f32 %v1199, 0.0
    %v1887 = vmax.f32 %v1202, 0.0
    %v1888 = vmax.f32 %v1205, 0.0
    %v1889 = vmax.f32 %v1208, 0.0
    %v1890 = vmax.f32 %v1211, 0.0
    %v1891 = vmax.f32 %v1214, 0.0
    %v1892 = vmax.f32 %v1217, 0.0
    %v1893 = vmax.f32 %v1220, 0.0
    %v1894 = vmax.f32 %v1223, 0.0
    %v1895 = vmax.f32 %v1226, 0.0
    %v1896 = vmax.f32 %v1229, 0.0
    %v1897 = vmax.f32 %v1232, 0.0
    %v1898 = vmax.f32 %v1235, 0.0
    %v1899 = vmax.f32 %v1238, 0.0
    %v1900 = vmax.f32 %v1241, 0.0
    %v1901 = vmax.f32 %v1244, 0.0
    %v1902 = vmax.f32 %v1247, 0.0
    %v1903 = vmax.f32 %v1250, 0.0
    %v1904 = vmax.f32 %v1253, 0.0
    %v1905 = vmax.f32 %v1256, 0.0
    %v1906 = vmax.f32 %v1259, 0.0
    %v1907 = vmax.f32 %v1262, 0.0
    %v1908 = vmax.f32 %v1265, 0.0
    %v1909 = vmax.f32 %v1268, 0.0
    %v1910 = vmax.f32 %v1271, 0.0
    %v1911 = vmax.f32 %v1274, 0.0
    %v1912 = vmax.f32 %v1277, 0.0
    %v1913 = vmax.f32 %v1280, 0.0
    %v1914 = vmax.f32 %v1283, 0.0
    %v1915 = vmax.f32 %v1286, 0.0
    %v1916 = vmax.f32 %v1289, 0.0
    %v1917 = vmax.f32 %v1292, 0.0
    %v1918 = vmax.f32 %v1295, 0.0
    %v1919 = vmax.f32 %v1298, 0.0
    %v1920 = vmax.f32 %v1301, 0.0
    %v1921 = vmax.f32 %v1304, 0.0
    %v1922 = vmax.f32 %v1307, 0.0
    %v1923 = vmax.f32 %v1310, 0.0
    %v1924 = vmax.f32 %v1313, 0.0
    %v1925 = vmax.f32 %v1316, 0.0
    %v1926 = vmax.f32 %v1319, 0.0
    %v1927 = vmax.f32 %v1322, 0.0
    %v1928 = vmax.f32 %v1325, 0.0
    %v1929 = vmax.f32 %v1328, 0.0
    %v1930 = vmax.f32 %v1331, 0.0
    %v1931 = vmax.f32 %v1334, 0.0
    %v1932 = vmax.f32 %v1337, 0.0
    %v1933 = vmax.f32 %v1340, 0.0
    %v1934 = vmax.f32 %v1343, 0.0
    %v1935 = vmax.f32 %v1346, 0.0
    %v1936 = vmax.f32 %v1349, 0.0
    %v1937 = vmax.f32 %v1352, 0.0
    %v1938 = vmax.f32 %v1355, 0.0
    %v1939 = vmax.f32 %v1358, 0.0
    %v1940 = vmax.f32 %v1361, 0.0
    %v1941 = vmax.f32 %v1364, 0.0
    %v1942 = vmax.f32 %v1367, 0.0
    %v1943 = vmax.f32 %v1370, 0.0
    %v1944 = vmax.f32 %v1373, 0.0
    %v1945 = vmax.f32 %v1376, 0.0
    %v1946 = vmax.f32 %v1379, 0.0
    %v1947 = vmax.f32 %v1382, 0.0
    %v1948 = vmax.f32 %v1385, 0.0
    %v1949 = vmax.f32 %v1388, 0.0
    %v1950 = vmax.f32 %v1391, 0.0
    %v1951 = vmax.f32 %v1394, 0.0
    %v1952 = vmax.f32 %v1397, 0.0
    %v1953 = vmax.f32 %v1400, 0.0
    %v1954 = vmax.f32 %v1403, 0.0
    %v1955 = vmax.f32 %v1406, 0.0
    %v1956 = vmax.f32 %v1409, 0.0
    %v1957 = vmax.f32 %v1412, 0.0
    %v1958 = vmax.f32 %v1415, 0.0
    %v1959 = vmax.f32 %v1418, 0.0
    %v1960 = vmax.f32 %v1421, 0.0
    %v1961 = vmax.f32 %v1424, 0.0
    %v1962 = vmax.f32 %v1427, 0.0
    %v1963 = vmax.f32 %v1430, 0.0
    %v1964 = vmax.f32 %v1433, 0.0
    %v1965 = vmax.f32 %v1436, 0.0
    %v1966 = vmax.f32 %v1439, 0.0
    %v1967 = vmax.f32 %v1442, 0.0
    %v1968 = vmax.f32 %v1445, 0.0
    %v1969 = vmax.f32 %v1448, 0.0
    %v1970 = vmax.f32 %v1451, 0.0
    %v1971 = vmax.f32 %v1454, 0.0
    %v1972 = vmax.f32 %v1457, 0.0
    %v1973 = vmax.f32 %v1460, 0.0
    %v1974 = vmax.f32 %v1463, 0.0
    %v1975 = vmax.f32 %v1466, 0.0
    %v1976 = vmax.f32 %v1469, 0.0
    %v1977 = vmax.f32 %v1472, 0.0
    %v1978 = vmax.f32 %v1475, 0.0
    %v1979 = vmax.f32 %v1478, 0.0
    %v1980 = vmax.f32 %v1481, 0.0
    %v1981 = vmax.f32 %v1484, 0.0
    %v1982 = vmax.f32 %v1487, 0.0
    %v1983 = vmax.f32 %v1490, 0.0
    %v1984 = vmax.f32 %v1493, 0.0
    %v1985 = vmax.f32 %v1496, 0.0
    %v1986 = vmax.f32 %v1499, 0.0
    %v1987 = vmax.f32 %v1502, 0.0
    %v1988 = vmax.f32 %v1505, 0.0
    %v1989 = vmax.f32 %v1508, 0.0
    %v1990 = vmax.f32 %v1511, 0.0
    %v1991 = vmax.f32 %v1514, 0.0
    %v1992 = vmax.f32 %v1517, 0.0
    %v1993 = vmax.f32 %v1520, 0.0
    %v1994 = vmax.f32 %v1523, 0.0
    %v1995 = vmax.f32 %v1526, 0.0
    %v1996 = vmax.f32 %v1529, 0.0
    %v1997 = vmax.f32 %v1532, 0.0
    %v1998 = vmax.f32 %v1535, 0.0
    %v1999 = vmax.f32 %v1538, 0.0
    %v2000 = vmax.f32 %v1541, 0.0
    %v2001 = vmax.f32 %v1544, 0.0
    %v2002 = vmax.f32 %v1547, 0.0
    %v2003 = vmax.f32 %v1550, 0.0
    %v2004 = vmax.f32 %v1553, 0.0
    %v2005 = vmax.f32 %v1556, 0.0
    %v2006 = vmax.f32 %v1559, 0.0
    %v2007 = vmax.f32 %v1562, 0.0
    %v2008 = vmax.f32 %v1565, 0.0
    %v2009 = vmax.f32 %v1568, 0.0
    %v2010 = vmax.f32 %v1571, 0.0
    %v2011 = vmax.f32 %v1574, 0.0
    %v2012 = vmax.f32 %v1577, 0.0
    %v2013 = vmax.f32 %v1580, 0.0
    %v2014 = vmax.f32 %v1583, 0.0
    %v2015 = vmax.f32 %v1586, 0.0
    %v2016 = vmax.f32 %v1589, 0.0
    %v2017 = vmax.f32 %v1592, 0.0
    %v2018 = vmax.f32 %v1595, 0.0
    %v2019 = vmax.f32 %v1598, 0.0
    %v2020 = vmax.f32 %v1601, 0.0
    %v2021 = vmax.f32 %v1604, 0.0
    %v2022 = vmax.f32 %v1607, 0.0
    %v2023 = vmax.f32 %v1610, 0.0
    %v2024 = vmax.f32 %v1613, 0.0
    %v2025 = vmax.f32 %v1616, 0.0
    %v2026 = vmax.f32 %v1619, 0.0
    %v2027 = vmax.f32 %v1622, 0.0
    %v2028 = vmax.f32 %v1625, 0.0
    %v2029 = vmax.f32 %v1628, 0.0
    %v2030 = vmax.f32 %v1631, 0.0
    %v2031 = vmax.f32 %v1634, 0.0
    %v2032 = vmax.f32 %v1637, 0.0
    %v2033 = vmax.f32 %v1640, 0.0
    %v2034 = vmax.f32 %v1643, 0.0
    %v2035 = vmax.f32 %v1646, 0.0
    %v2036 = vmax.f32 %v1649, 0.0
    %v2037 = vmax.f32 %v1652, 0.0
    %v2038 = vmax.f32 %v1655, 0.0
    %v2039 = vmax.f32 %v1658, 0.0
    %v2040 = vmax.f32 %v1661, 0.0
    %v2041 = vmax.f32 %v1664, 0.0
    %v2042 = vmax.f32 %v1667, 0.0
    %v2043 = vmax.f32 %v1670, 0.0
    %v2044 = vmax.f32 %v1673, 0.0
    %v2045 = vmax.f32 %v1676, 0.0
    %v2046 = vmax.f32 %v1679, 0.0
    %v2047 = vmax.f32 %v1682, 0.0
    %v2048 = vmax.f32 %v1685, 0.0
    %v2049 = vmax.f32 %v1688, 0.0
    %v2050 = vmax.f32 %v1691, 0.0
    %v2051 = vmax.f32 %v1694, 0.0
    %v2052 = vmax.f32 %v1697, 0.0
    %v2053 = vmax.f32 %v1700, 0.0
    %v2054 = vmax.f32 %v1703, 0.0
    %v2055 = vmax.f32 %v1706, 0.0
    %v2056 = vmax.f32 %v1709, 0.0
    %v2057 = vmax.f32 %v1712, 0.0
    %v2058 = vmax.f32 %v1715, 0.0
    %v2059 = vmax.f32 %v1718, 0.0
    %v2060 = vmax.f32 %v1721, 0.0
    %v2061 = vmax.f32 %v1724, 0.0
    %v2062 = vmax.f32 %v1727, 0.0
    %v2063 = vmax.f32 %v1730, 0.0
    %v2064 = vmax.f32 %v1733, 0.0
    %v2065 = vmax.f32 %v1736, 0.0
    %v2066 = vmax.f32 %v1739, 0.0
    %v2067 = vmax.f32 %v1742, 0.0
    %v2068 = vmax.f32 %v1745, 0.0
    %v2069 = vmax.f32 %v1748, 0.0
    %v2070 = vmax.f32 %v1751, 0.0
    %v2071 = vmax.f32 %v1754, 0.0
    %v2072 = vmax.f32 %v1757, 0.0
    %v2073 = vmax.f32 %v1760, 0.0
    %v2074 = vmax.f32 %v1763, 0.0
    %v2075 = vmax.f32 %v1766, 0.0
    %v2076 = vmax.f32 %v1769, 0.0
    %v2077 = vmax.f32 %v1772, 0.0
    %v2078 = vmax.f32 %v1775, 0.0
    %v2079 = vmax.f32 %v1778, 0.0
    %v2080 = vmax.f32 %v1781, 0.0
    %v2081 = vmax.f32 %v1784, 0.0
    %v2082 = vmax.f32 %v1787, 0.0
    %v2083 = vmax.f32 %v1790, 0.0
    %v2084 = vmax.f32 %v1793, 0.0
    %v2085 = vmax.f32 %v1796, 0.0
    %v2086 = vmax.f32 %v1799, 0.0
    %v2087 = vmax.f32 %v1802, 0.0
    %v2088 = vmax.f32 %v1805, 0.0
    %v2089 = vmax.f32 %v1808, 0.0
    %v2090 = vmax.f32 %v1811, 0.0
    %v2091 = vmax.f32 %v1814, 0.0
    %v2092 = vmax.f32 %v1817, 0.0
    %v2093 = vmax.f32 %v1820, 0.0
    %v2094 = vmax.f32 %v1823, 0.0
    %v2095 = vmax.f32 %v1826, 0.0
    %v2096 = vmax.f32 %v1829, 0.0
    %v2097 = vmax.f32 %v1832, 0.0
    %v2098 = vmax.f32 %v1835, 0.0
    %v2099 = vmax.f32 %v1838, 0.0
    %v2100 = vmax.f32 %v1841, 0.0
    %v2101 = vmax.f32 %v1844, 0.0
    %v2102 = vlaneseq
    %v2103 = vshrl.u32 %v2102, 7
    %v2104 = vlaneseq
    %v2105 = vand.u32 %v2104, 127
    %v2106 = vadd.s32 %v2105, 128
    %v2107 = vadd.s32 %v2105, 256
    %v2108 = vadd.s32 %v2105, 384
    %v2109 = vadd.s32 %v2105, 512
    %v2110 = vadd.s32 %v2105, 640
    %v2111 = vadd.s32 %v2105, 768
    %v2112 = vadd.s32 %v2105, 896
    %v2113 = vadd.s32 %v2105, 1024
    %v2114 = vadd.s32 %v2105, 1152
    %v2115 = vadd.s32 %v2105, 1280
    %v2116 = vadd.s32 %v2105, 1408
    %v2117 = vadd.s32 %v2105, 1536
    %v2118 = vadd.s32 %v2105, 1664
    %v2119 = vadd.s32 %v2105, 1792
    %v2120 = vadd.s32 %v2105, 1920
    %v2121 = vmul.u32 %v2103, 256
    %vm2122 = vcmp.ge.s32.totalorder %v2105, %v2121
    %vm2123 = vcmp.ge.s32.totalorder %v2106, %v2121
    %vm2124 = vcmp.ge.s32.totalorder %v2107, %v2121
    %vm2125 = vcmp.ge.s32.totalorder %v2108, %v2121
    %vm2126 = vcmp.ge.s32.totalorder %v2109, %v2121
    %vm2127 = vcmp.ge.s32.totalorder %v2110, %v2121
    %vm2128 = vcmp.ge.s32.totalorder %v2111, %v2121
    %vm2129 = vcmp.ge.s32.totalorder %v2112, %v2121
    %vm2130 = vcmp.ge.s32.totalorder %v2113, %v2121
    %vm2131 = vcmp.ge.s32.totalorder %v2114, %v2121
    %vm2132 = vcmp.ge.s32.totalorder %v2115, %v2121
    %vm2133 = vcmp.ge.s32.totalorder %v2116, %v2121
    %vm2134 = vcmp.ge.s32.totalorder %v2117, %v2121
    %vm2135 = vcmp.ge.s32.totalorder %v2118, %v2121
    %vm2136 = vcmp.ge.s32.totalorder %v2119, %v2121
    %vm2137 = vcmp.ge.s32.totalorder %v2120, %v2121
    %v2138 = vadd.s32 %v2121, 256
    %vm2139 = vcmp.lt.s32.totalorder %v2105, %v2138
    %vm2140 = vcmp.lt.s32.totalorder %v2106, %v2138
    %vm2141 = vcmp.lt.s32.totalorder %v2107, %v2138
    %vm2142 = vcmp.lt.s32.totalorder %v2108, %v2138
    %vm2143 = vcmp.lt.s32.totalorder %v2109, %v2138
    %vm2144 = vcmp.lt.s32.totalorder %v2110, %v2138
    %vm2145 = vcmp.lt.s32.totalorder %v2111, %v2138
    %vm2146 = vcmp.lt.s32.totalorder %v2112, %v2138
    %vm2147 = vcmp.lt.s32.totalorder %v2113, %v2138
    %vm2148 = vcmp.lt.s32.totalorder %v2114, %v2138
    %vm2149 = vcmp.lt.s32.totalorder %v2115, %v2138
    %vm2150 = vcmp.lt.s32.totalorder %v2116, %v2138
    %vm2151 = vcmp.lt.s32.totalorder %v2117, %v2138
    %vm2152 = vcmp.lt.s32.totalorder %v2118, %v2138
    %vm2153 = vcmp.lt.s32.totalorder %v2119, %v2138
    %vm2154 = vcmp.lt.s32.totalorder %v2120, %v2138
    %vm2155 = vmand %vm2122, %vm2139
    %vm2156 = vmand %vm2123, %vm2140
    %vm2157 = vmand %vm2124, %vm2141
    %vm2158 = vmand %vm2125, %vm2142
    %vm2159 = vmand %vm2126, %vm2143
    %vm2160 = vmand %vm2127, %vm2144
    %vm2161 = vmand %vm2128, %vm2145
    %vm2162 = vmand %vm2129, %vm2146
    %vm2163 = vmand %vm2130, %vm2147
    %vm2164 = vmand %vm2131, %vm2148
    %vm2165 = vmand %vm2132, %vm2149
    %vm2166 = vmand %vm2133, %vm2150
    %vm2167 = vmand %vm2134, %vm2151
    %vm2168 = vmand %vm2135, %vm2152
    %vm2169 = vmand %vm2136, %vm2153
    %vm2170 = vmand %vm2137, %vm2154
    %v2171 = vsel %vm2155, 0.00390625, 0.0
    %v2172 = vsel %vm2156, 0.00390625, 0.0
    %v2173 = vsel %vm2157, 0.00390625, 0.0
    %v2174 = vsel %vm2158, 0.00390625, 0.0
    %v2175 = vsel %vm2159, 0.00390625, 0.0
    %v2176 = vsel %vm2160, 0.00390625, 0.0
    %v2177 = vsel %vm2161, 0.00390625, 0.0
    %v2178 = vsel %vm2162, 0.00390625, 0.0
    %v2179 = vsel %vm2163, 0.00390625, 0.0
    %v2180 = vsel %vm2164, 0.00390625, 0.0
    %v2181 = vsel %vm2165, 0.00390625, 0.0
    %v2182 = vsel %vm2166, 0.00390625, 0.0
    %v2183 = vsel %vm2167, 0.00390625, 0.0
    %v2184 = vsel %vm2168, 0.00390625, 0.0
    %v2185 = vsel %vm2169, 0.00390625, 0.0
    %v2186 = vsel %vm2170, 0.00390625, 0.0
    %2187 = vmatpush.msra.mxu0 %v1861
    %2188 = vmatpush.msra.mxu0 %v1860
    %2189 = vmatpush.msra.mxu0 %v1859
    %2190 = vmatpush.msra.mxu0 %v1858
    %2191 = vmatpush.msra.mxu0 %v1857
    %2192 = vmatpush.msra.mxu0 %v1856
    %2193 = vmatpush.msra.mxu0 %v1855
    %2194 = vmatpush.msra.mxu0 %v1854
    %2195 = vmatpush.msra.mxu0 %v1853
    %2196 = vmatpush.msra.mxu0 %v1852
    %2197 = vmatpush.msra.mxu0 %v1851
    %2198 = vmatpush.msra.mxu0 %v1850
    %2199 = vmatpush.msra.mxu0 %v1849
    %2200 = vmatpush.msra.mxu0 %v1848
    %2201 = vmatpush.msra.mxu0 %v1847
    %2202 = vmatpush.msra.mxu0 %v1846
    %2203 = vmatmul.f32.gmra.mxu0 %v2171
    %v2204 = vpop.f32.mrf.mxu0
    %v2205 = vadd.f32 0.0, %v2204
    %2206 = vdwg.mxu0
    %2207 = vmatpush.msra.mxu0 %v1877
    %2208 = vmatpush.msra.mxu0 %v1876
    %2209 = vmatpush.msra.mxu0 %v1875
    %2210 = vmatpush.msra.mxu0 %v1874
    %2211 = vmatpush.msra.mxu0 %v1873
    %2212 = vmatpush.msra.mxu0 %v1872
    %2213 = vmatpush.msra.mxu0 %v1871
    %2214 = vmatpush.msra.mxu0 %v1870
    %2215 = vmatpush.msra.mxu0 %v1869
    %2216 = vmatpush.msra.mxu0 %v1868
    %2217 = vmatpush.msra.mxu0 %v1867
    %2218 = vmatpush.msra.mxu0 %v1866
    %2219 = vmatpush.msra.mxu0 %v1865
    %2220 = vmatpush.msra.mxu0 %v1864
    %2221 = vmatpush.msra.mxu0 %v1863
    %2222 = vmatpush.msra.mxu0 %v1862
    %2223 = vmatmul.f32.gmra.mxu0 %v2172
    %v2224 = vpop.f32.mrf.mxu0
    %v2225 = vadd.f32 %v2205, %v2224
    %2226 = vdwg.mxu0
    %2227 = vmatpush.msra.mxu0 %v1893
    %2228 = vmatpush.msra.mxu0 %v1892
    %2229 = vmatpush.msra.mxu0 %v1891
    %2230 = vmatpush.msra.mxu0 %v1890
    %2231 = vmatpush.msra.mxu0 %v1889
    %2232 = vmatpush.msra.mxu0 %v1888
    %2233 = vmatpush.msra.mxu0 %v1887
    %2234 = vmatpush.msra.mxu0 %v1886
    %2235 = vmatpush.msra.mxu0 %v1885
    %2236 = vmatpush.msra.mxu0 %v1884
    %2237 = vmatpush.msra.mxu0 %v1883
    %2238 = vmatpush.msra.mxu0 %v1882
    %2239 = vmatpush.msra.mxu0 %v1881
    %2240 = vmatpush.msra.mxu0 %v1880
    %2241 = vmatpush.msra.mxu0 %v1879
    %2242 = vmatpush.msra.mxu0 %v1878
    %2243 = vmatmul.f32.gmra.mxu0 %v2173
    %v2244 = vpop.f32.mrf.mxu0
    %v2245 = vadd.f32 %v2225, %v2244
    %2246 = vdwg.mxu0
    %2247 = vmatpush.msra.mxu0 %v1909
    %2248 = vmatpush.msra.mxu0 %v1908
    %2249 = vmatpush.msra.mxu0 %v1907
    %2250 = vmatpush.msra.mxu0 %v1906
    %2251 = vmatpush.msra.mxu0 %v1905
    %2252 = vmatpush.msra.mxu0 %v1904
    %2253 = vmatpush.msra.mxu0 %v1903
    %2254 = vmatpush.msra.mxu0 %v1902
    %2255 = vmatpush.msra.mxu0 %v1901
    %2256 = vmatpush.msra.mxu0 %v1900
    %2257 = vmatpush.msra.mxu0 %v1899
    %2258 = vmatpush.msra.mxu0 %v1898
    %2259 = vmatpush.msra.mxu0 %v1897
    %2260 = vmatpush.msra.mxu0 %v1896
    %2261 = vmatpush.msra.mxu0 %v1895
    %2262 = vmatpush.msra.mxu0 %v1894
    %2263 = vmatmul.f32.gmra.mxu0 %v2174
    %v2264 = vpop.f32.mrf.mxu0
    %v2265 = vadd.f32 %v2245, %v2264
    %2266 = vdwg.mxu0
    %2267 = vmatpush.msra.mxu0 %v1925
    %2268 = vmatpush.msra.mxu0 %v1924
    %2269 = vmatpush.msra.mxu0 %v1923
    %2270 = vmatpush.msra.mxu0 %v1922
    %2271 = vmatpush.msra.mxu0 %v1921
    %2272 = vmatpush.msra.mxu0 %v1920
    %2273 = vmatpush.msra.mxu0 %v1919
    %2274 = vmatpush.msra.mxu0 %v1918
    %2275 = vmatpush.msra.mxu0 %v1917
    %2276 = vmatpush.msra.mxu0 %v1916
    %2277 = vmatpush.msra.mxu0 %v1915
    %2278 = vmatpush.msra.mxu0 %v1914
    %2279 = vmatpush.msra.mxu0 %v1913
    %2280 = vmatpush.msra.mxu0 %v1912
    %2281 = vmatpush.msra.mxu0 %v1911
    %2282 = vmatpush.msra.mxu0 %v1910
    %2283 = vmatmul.f32.gmra.mxu0 %v2175
    %v2284 = vpop.f32.mrf.mxu0
    %v2285 = vadd.f32 %v2265, %v2284
    %2286 = vdwg.mxu0
    %2287 = vmatpush.msra.mxu0 %v1941
    %2288 = vmatpush.msra.mxu0 %v1940
    %2289 = vmatpush.msra.mxu0 %v1939
    %2290 = vmatpush.msra.mxu0 %v1938
    %2291 = vmatpush.msra.mxu0 %v1937
    %2292 = vmatpush.msra.mxu0 %v1936
    %2293 = vmatpush.msra.mxu0 %v1935
    %2294 = vmatpush.msra.mxu0 %v1934
    %2295 = vmatpush.msra.mxu0 %v1933
    %2296 = vmatpush.msra.mxu0 %v1932
    %2297 = vmatpush.msra.mxu0 %v1931
    %2298 = vmatpush.msra.mxu0 %v1930
    %2299 = vmatpush.msra.mxu0 %v1929
    %2300 = vmatpush.msra.mxu0 %v1928
    %2301 = vmatpush.msra.mxu0 %v1927
    %2302 = vmatpush.msra.mxu0 %v1926
    %2303 = vmatmul.f32.gmra.mxu0 %v2176
    %v2304 = vpop.f32.mrf.mxu0
    %v2305 = vadd.f32 %v2285, %v2304
    %2306 = vdwg.mxu0
    %2307 = vmatpush.msra.mxu0 %v1957
    %2308 = vmatpush.msra.mxu0 %v1956
    %2309 = vmatpush.msra.mxu0 %v1955
    %2310 = vmatpush.msra.mxu0 %v1954
    %2311 = vmatpush.msra.mxu0 %v1953
    %2312 = vmatpush.msra.mxu0 %v1952
    %2313 = vmatpush.msra.mxu0 %v1951
    %2314 = vmatpush.msra.mxu0 %v1950
    %2315 = vmatpush.msra.mxu0 %v1949
    %2316 = vmatpush.msra.mxu0 %v1948
    %2317 = vmatpush.msra.mxu0 %v1947
    %2318 = vmatpush.msra.mxu0 %v1946
    %2319 = vmatpush.msra.mxu0 %v1945
    %2320 = vmatpush.msra.mxu0 %v1944
    %2321 = vmatpush.msra.mxu0 %v1943
    %2322 = vmatpush.msra.mxu0 %v1942
    %2323 = vmatmul.f32.gmra.mxu0 %v2177
    %v2324 = vpop.f32.mrf.mxu0
    %v2325 = vadd.f32 %v2305, %v2324
    %2326 = vdwg.mxu0
    %2327 = vmatpush.msra.mxu0 %v1973
    %2328 = vmatpush.msra.mxu0 %v1972
    %2329 = vmatpush.msra.mxu0 %v1971
    %2330 = vmatpush.msra.mxu0 %v1970
    %2331 = vmatpush.msra.mxu0 %v1969
    %2332 = vmatpush.msra.mxu0 %v1968
    %2333 = vmatpush.msra.mxu0 %v1967
    %2334 = vmatpush.msra.mxu0 %v1966
    %2335 = vmatpush.msra.mxu0 %v1965
    %2336 = vmatpush.msra.mxu0 %v1964
    %2337 = vmatpush.msra.mxu0 %v1963
    %2338 = vmatpush.msra.mxu0 %v1962
    %2339 = vmatpush.msra.mxu0 %v1961
    %2340 = vmatpush.msra.mxu0 %v1960
    %2341 = vmatpush.msra.mxu0 %v1959
    %2342 = vmatpush.msra.mxu0 %v1958
    %2343 = vmatmul.f32.gmra.mxu0 %v2178
    %v2344 = vpop.f32.mrf.mxu0
    %v2345 = vadd.f32 %v2325, %v2344
    %2346 = vdwg.mxu0
    %2347 = vmatpush.msra.mxu0 %v1989
    %2348 = vmatpush.msra.mxu0 %v1988
    %2349 = vmatpush.msra.mxu0 %v1987
    %2350 = vmatpush.msra.mxu0 %v1986
    %2351 = vmatpush.msra.mxu0 %v1985
    %2352 = vmatpush.msra.mxu0 %v1984
    %2353 = vmatpush.msra.mxu0 %v1983
    %2354 = vmatpush.msra.mxu0 %v1982
    %2355 = vmatpush.msra.mxu0 %v1981
    %2356 = vmatpush.msra.mxu0 %v1980
    %2357 = vmatpush.msra.mxu0 %v1979
    %2358 = vmatpush.msra.mxu0 %v1978
    %2359 = vmatpush.msra.mxu0 %v1977
    %2360 = vmatpush.msra.mxu0 %v1976
    %2361 = vmatpush.msra.mxu0 %v1975
    %2362 = vmatpush.msra.mxu0 %v1974
    %2363 = vmatmul.f32.gmra.mxu0 %v2179
    %v2364 = vpop.f32.mrf.mxu0
    %v2365 = vadd.f32 %v2345, %v2364
    %2366 = vdwg.mxu0
    %2367 = vmatpush.msra.mxu0 %v2005
    %2368 = vmatpush.msra.mxu0 %v2004
    %2369 = vmatpush.msra.mxu0 %v2003
    %2370 = vmatpush.msra.mxu0 %v2002
    %2371 = vmatpush.msra.mxu0 %v2001
    %2372 = vmatpush.msra.mxu0 %v2000
    %2373 = vmatpush.msra.mxu0 %v1999
    %2374 = vmatpush.msra.mxu0 %v1998
    %2375 = vmatpush.msra.mxu0 %v1997
    %2376 = vmatpush.msra.mxu0 %v1996
    %2377 = vmatpush.msra.mxu0 %v1995
    %2378 = vmatpush.msra.mxu0 %v1994
    %2379 = vmatpush.msra.mxu0 %v1993
    %2380 = vmatpush.msra.mxu0 %v1992
    %2381 = vmatpush.msra.mxu0 %v1991
    %2382 = vmatpush.msra.mxu0 %v1990
    %2383 = vmatmul.f32.gmra.mxu0 %v2180
    %v2384 = vpop.f32.mrf.mxu0
    %v2385 = vadd.f32 %v2365, %v2384
    %2386 = vdwg.mxu0
    %2387 = vmatpush.msra.mxu0 %v2021
    %2388 = vmatpush.msra.mxu0 %v2020
    %2389 = vmatpush.msra.mxu0 %v2019
    %2390 = vmatpush.msra.mxu0 %v2018
    %2391 = vmatpush.msra.mxu0 %v2017
    %2392 = vmatpush.msra.mxu0 %v2016
    %2393 = vmatpush.msra.mxu0 %v2015
    %2394 = vmatpush.msra.mxu0 %v2014
    %2395 = vmatpush.msra.mxu0 %v2013
    %2396 = vmatpush.msra.mxu0 %v2012
    %2397 = vmatpush.msra.mxu0 %v2011
    %2398 = vmatpush.msra.mxu0 %v2010
    %2399 = vmatpush.msra.mxu0 %v2009
    %2400 = vmatpush.msra.mxu0 %v2008
    %2401 = vmatpush.msra.mxu0 %v2007
    %2402 = vmatpush.msra.mxu0 %v2006
    %2403 = vmatmul.f32.gmra.mxu0 %v2181
    %v2404 = vpop.f32.mrf.mxu0
    %v2405 = vadd.f32 %v2385, %v2404
    %2406 = vdwg.mxu0
    %2407 = vmatpush.msra.mxu0 %v2037
    %2408 = vmatpush.msra.mxu0 %v2036
    %2409 = vmatpush.msra.mxu0 %v2035
    %2410 = vmatpush.msra.mxu0 %v2034
    %2411 = vmatpush.msra.mxu0 %v2033
    %2412 = vmatpush.msra.mxu0 %v2032
    %2413 = vmatpush.msra.mxu0 %v2031
    %2414 = vmatpush.msra.mxu0 %v2030
    %2415 = vmatpush.msra.mxu0 %v2029
    %2416 = vmatpush.msra.mxu0 %v2028
    %2417 = vmatpush.msra.mxu0 %v2027
    %2418 = vmatpush.msra.mxu0 %v2026
    %2419 = vmatpush.msra.mxu0 %v2025
    %2420 = vmatpush.msra.mxu0 %v2024
    %2421 = vmatpush.msra.mxu0 %v2023
    %2422 = vmatpush.msra.mxu0 %v2022
    %2423 = vmatmul.f32.gmra.mxu0 %v2182
    %v2424 = vpop.f32.mrf.mxu0
    %v2425 = vadd.f32 %v2405, %v2424
    %2426 = vdwg.mxu0
    %2427 = vmatpush.msra.mxu0 %v2053
    %2428 = vmatpush.msra.mxu0 %v2052
    %2429 = vmatpush.msra.mxu0 %v2051
    %2430 = vmatpush.msra.mxu0 %v2050
    %2431 = vmatpush.msra.mxu0 %v2049
    %2432 = vmatpush.msra.mxu0 %v2048
    %2433 = vmatpush.msra.mxu0 %v2047
    %2434 = vmatpush.msra.mxu0 %v2046
    %2435 = vmatpush.msra.mxu0 %v2045
    %2436 = vmatpush.msra.mxu0 %v2044
    %2437 = vmatpush.msra.mxu0 %v2043
    %2438 = vmatpush.msra.mxu0 %v2042
    %2439 = vmatpush.msra.mxu0 %v2041
    %2440 = vmatpush.msra.mxu0 %v2040
    %2441 = vmatpush.msra.mxu0 %v2039
    %2442 = vmatpush.msra.mxu0 %v2038
    %2443 = vmatmul.f32.gmra.mxu0 %v2183
    %v2444 = vpop.f32.mrf.mxu0
    %v2445 = vadd.f32 %v2425, %v2444
    %2446 = vdwg.mxu0
    %2447 = vmatpush.msra.mxu0 %v2069
    %2448 = vmatpush.msra.mxu0 %v2068
    %2449 = vmatpush.msra.mxu0 %v2067
    %2450 = vmatpush.msra.mxu0 %v2066
    %2451 = vmatpush.msra.mxu0 %v2065
    %2452 = vmatpush.msra.mxu0 %v2064
    %2453 = vmatpush.msra.mxu0 %v2063
    %2454 = vmatpush.msra.mxu0 %v2062
    %2455 = vmatpush.msra.mxu0 %v2061
    %2456 = vmatpush.msra.mxu0 %v2060
    %2457 = vmatpush.msra.mxu0 %v2059
    %2458 = vmatpush.msra.mxu0 %v2058
    %2459 = vmatpush.msra.mxu0 %v2057
    %2460 = vmatpush.msra.mxu0 %v2056
    %2461 = vmatpush.msra.mxu0 %v2055
    %2462 = vmatpush.msra.mxu0 %v2054
    %2463 = vmatmul.f32.gmra.mxu0 %v2184
    %v2464 = vpop.f32.mrf.mxu0
    %v2465 = vadd.f32 %v2445, %v2464
    %2466 = vdwg.mxu0
    %2467 = vmatpush.msra.mxu0 %v2085
    %2468 = vmatpush.msra.mxu0 %v2084
    %2469 = vmatpush.msra.mxu0 %v2083
    %2470 = vmatpush.msra.mxu0 %v2082
    %2471 = vmatpush.msra.mxu0 %v2081
    %2472 = vmatpush.msra.mxu0 %v2080
    %2473 = vmatpush.msra.mxu0 %v2079
    %2474 = vmatpush.msra.mxu0 %v2078
    %2475 = vmatpush.msra.mxu0 %v2077
    %2476 = vmatpush.msra.mxu0 %v2076
    %2477 = vmatpush.msra.mxu0 %v2075
    %2478 = vmatpush.msra.mxu0 %v2074
    %2479 = vmatpush.msra.mxu0 %v2073
    %2480 = vmatpush.msra.mxu0 %v2072
    %2481 = vmatpush.msra.mxu0 %v2071
    %2482 = vmatpush.msra.mxu0 %v2070
    %2483 = vmatmul.f32.gmra.mxu0 %v2185
    %v2484 = vpop.f32.mrf.mxu0
    %v2485 = vadd.f32 %v2465, %v2484
    %2486 = vdwg.mxu0
    %2487 = vmatpush.msra.mxu0 %v2101
    %2488 = vmatpush.msra.mxu0 %v2100
    %2489 = vmatpush.msra.mxu0 %v2099
    %2490 = vmatpush.msra.mxu0 %v2098
    %2491 = vmatpush.msra.mxu0 %v2097
    %2492 = vmatpush.msra.mxu0 %v2096
    %2493 = vmatpush.msra.mxu0 %v2095
    %2494 = vmatpush.msra.mxu0 %v2094
    %2495 = vmatpush.msra.mxu0 %v2093
    %2496 = vmatpush.msra.mxu0 %v2092
    %2497 = vmatpush.msra.mxu0 %v2091
    %2498 = vmatpush.msra.mxu0 %v2090
    %2499 = vmatpush.msra.mxu0 %v2089
    %2500 = vmatpush.msra.mxu0 %v2088
    %2501 = vmatpush.msra.mxu0 %v2087
    %2502 = vmatpush.msra.mxu0 %v2086
    %2503 = vmatmul.f32.gmra.mxu0 %v2186
    %v2504 = vpop.f32.mrf.mxu0
    %v2505 = vadd.f32 %v2485, %v2504
    %2506 = vdwg.mxu0
    %v2507 = vld [vmem:[%s2] sm:$0xff]
    %v2508 = vld [vmem:[%s2 + $0x8] sm:$0xff]
    %v2509 = vld [vmem:[%s2 + $0x10] sm:$0xff]
    %v2510 = vld [vmem:[%s2 + $0x18] sm:$0xff]
    %v2511 = vld [vmem:[%s2 + $0x20] sm:$0xff]
    %v2512 = vld [vmem:[%s2 + $0x28] sm:$0xff]
    %v2513 = vld [vmem:[%s2 + $0x30] sm:$0xff]
    %v2514 = vld [vmem:[%s2 + $0x38] sm:$0xff]
    %v2515 = vld [vmem:[%s2 + $0x40] sm:$0xff]
    %v2516 = vld [vmem:[%s2 + $0x48] sm:$0xff]
    %v2517 = vld [vmem:[%s2 + $0x50] sm:$0xff]
    %v2518 = vld [vmem:[%s2 + $0x58] sm:$0xff]
    %v2519 = vld [vmem:[%s2 + $0x60] sm:$0xff]
    %v2520 = vld [vmem:[%s2 + $0x68] sm:$0xff]
    %v2521 = vld [vmem:[%s2 + $0x70] sm:$0xff]
    %v2522 = vld [vmem:[%s2 + $0x78] sm:$0xff]
    %vm2523 = vcmask 261120
    %v2525 = vsel %vm2523, %v2505, 0
    %2527 = vmatpush.msra.mxu0 0.0
    %2528 = vmatpush.msra.mxu0 0.0
    %2529 = vmatpush.msra.mxu0 0.0
    %2530 = vmatpush.msra.mxu0 0.0
    %2531 = vmatpush.msra.mxu0 0.0
    %2532 = vmatpush.msra.mxu0 0.0
    %2533 = vmatpush.msra.mxu0 0.0
    %2534 = vmatpush.msra.mxu0 0.0
    %2535 = vmatpush.msra.mxu0 0.0
    %2536 = vmatpush.msra.mxu0 0.0
    %2537 = vmatpush.msra.mxu0 0.0
    %2538 = vmatpush.msra.mxu0 0.0
    %2539 = vmatpush.msra.mxu0 %v2519
    %2540 = vmatpush.msra.mxu0 %v2515
    %2541 = vmatpush.msra.mxu0 %v2511
    %2542 = vmatpush.msra.mxu0 %v2507
    %2543 = vmatmul.f32.gmra.mxu0 %v2525
    %v2544 = vpop.f32.mrf.mxu0
    %v2545 = vadd.f32 0.0, %v2544
    %2546 = vdwg.mxu0
    %2547 = vmatpush.msra.mxu0 0.0
    %2548 = vmatpush.msra.mxu0 0.0
    %2549 = vmatpush.msra.mxu0 0.0
    %2550 = vmatpush.msra.mxu0 0.0
    %2551 = vmatpush.msra.mxu0 0.0
    %2552 = vmatpush.msra.mxu0 0.0
    %2553 = vmatpush.msra.mxu0 0.0
    %2554 = vmatpush.msra.mxu0 0.0
    %2555 = vmatpush.msra.mxu0 0.0
    %2556 = vmatpush.msra.mxu0 0.0
    %2557 = vmatpush.msra.mxu0 0.0
    %2558 = vmatpush.msra.mxu0 0.0
    %2559 = vmatpush.msra.mxu0 %v2520
    %2560 = vmatpush.msra.mxu0 %v2516
    %2561 = vmatpush.msra.mxu0 %v2512
    %2562 = vmatpush.msra.mxu0 %v2508
    %2563 = vmatmul.f32.gmra.mxu0 %v2525
    %v2564 = vpop.f32.mrf.mxu0
    %v2565 = vadd.f32 0.0, %v2564
    %2566 = vdwg.mxu0
    %2567 = vmatpush.msra.mxu0 0.0
    %2568 = vmatpush.msra.mxu0 0.0
    %2569 = vmatpush.msra.mxu0 0.0
    %2570 = vmatpush.msra.mxu0 0.0
    %2571 = vmatpush.msra.mxu0 0.0
    %2572 = vmatpush.msra.mxu0 0.0
    %2573 = vmatpush.msra.mxu0 0.0
    %2574 = vmatpush.msra.mxu0 0.0
    %2575 = vmatpush.msra.mxu0 0.0
    %2576 = vmatpush.msra.mxu0 0.0
    %2577 = vmatpush.msra.mxu0 0.0
    %2578 = vmatpush.msra.mxu0 0.0
    %2579 = vmatpush.msra.mxu0 %v2521
    %2580 = vmatpush.msra.mxu0 %v2517
    %2581 = vmatpush.msra.mxu0 %v2513
    %2582 = vmatpush.msra.mxu0 %v2509
    %2583 = vmatmul.f32.gmra.mxu0 %v2525
    %v2584 = vpop.f32.mrf.mxu0
    %v2585 = vadd.f32 0.0, %v2584
    %2586 = vdwg.mxu0
    %2587 = vmatpush.msra.mxu0 0.0
    %2588 = vmatpush.msra.mxu0 0.0
    %2589 = vmatpush.msra.mxu0 0.0
    %2590 = vmatpush.msra.mxu0 0.0
    %2591 = vmatpush.msra.mxu0 0.0
    %2592 = vmatpush.msra.mxu0 0.0
    %2593 = vmatpush.msra.mxu0 0.0
    %2594 = vmatpush.msra.mxu0 0.0
    %2595 = vmatpush.msra.mxu0 0.0
    %2596 = vmatpush.msra.mxu0 0.0
    %2597 = vmatpush.msra.mxu0 0.0
    %2598 = vmatpush.msra.mxu0 0.0
    %2599 = vmatpush.msra.mxu0 %v2522
    %2600 = vmatpush.msra.mxu0 %v2518
    %2601 = vmatpush.msra.mxu0 %v2514
    %2602 = vmatpush.msra.mxu0 %v2510
    %2603 = vmatmul.f32.gmra.mxu0 %v2525
    %v2604 = vpop.f32.mrf.mxu0
    %v2605 = vadd.f32 0.0, %v2604
    %2606 = vdwg.mxu0
    %vm2607 = vcmp.lt.s32.totalorder %v2103, 4
    %v2608 = vsel %vm2607, 1, 0
    %v2609 = vcvt.s32.f32 %v2608
    %v2610 = vsub.f32 1.0, %v2609
    %v2611 = vmul.f32 %v2545, %v2609
    %v2612 = vmul.f32 %v2565, %v2609
    %v2613 = vmul.f32 %v2585, %v2609
    %v2614 = vmul.f32 %v2605, %v2609
    %v2615 = vrot.slane %v2611, 4
    %v2616 = vadd.f32 %v2611, %v2615
    %v2617 = vrot.slane %v2616, 2
    %v2618 = vadd.f32 %v2616, %v2617
    %v2619 = vrot.slane %v2618, 1
    %v2620 = vadd.f32 %v2618, %v2619
    %v2621 = vrot.slane %v2612, 4
    %v2622 = vadd.f32 %v2612, %v2621
    %v2623 = vrot.slane %v2622, 2
    %v2624 = vadd.f32 %v2622, %v2623
    %v2625 = vrot.slane %v2624, 1
    %v2626 = vadd.f32 %v2624, %v2625
    %v2627 = vrot.slane %v2613, 4
    %v2628 = vadd.f32 %v2613, %v2627
    %v2629 = vrot.slane %v2628, 2
    %v2630 = vadd.f32 %v2628, %v2629
    %v2631 = vrot.slane %v2630, 1
    %v2632 = vadd.f32 %v2630, %v2631
    %v2633 = vrot.slane %v2614, 4
    %v2634 = vadd.f32 %v2614, %v2633
    %v2635 = vrot.slane %v2634, 2
    %v2636 = vadd.f32 %v2634, %v2635
    %v2637 = vrot.slane %v2636, 1
    %v2638 = vadd.f32 %v2636, %v2637
    %v2639 = vrcp.pop 4.0
    %v2640 = vmul.f32 4.0, %v2639
    %v2641 = vsub.f32 1.0, %v2640
    %v2642 = vmul.f32 %v2639, %v2641
    %v2643 = vadd.f32 %v2639, %v2642
    %vm2644 = vweird.f32 %v2639
    %v2645 = vsel %vm2644, %v2639, %v2643
    %v2646 = vmul.f32 %v2620, %v2645
    %v2647 = vmul.f32 %v2626, %v2645
    %v2648 = vmul.f32 %v2632, %v2645
    %v2649 = vmul.f32 %v2638, %v2645
    %v2650 = vmul.f32 %v2545, %v2610
    %v2651 = vmul.f32 %v2565, %v2610
    %v2652 = vmul.f32 %v2585, %v2610
    %v2653 = vmul.f32 %v2605, %v2610
    %v2654 = vrot.slane %v2650, 4
    %v2655 = vadd.f32 %v2650, %v2654
    %v2656 = vrot.slane %v2655, 2
    %v2657 = vadd.f32 %v2655, %v2656
    %v2658 = vrot.slane %v2657, 1
    %v2659 = vadd.f32 %v2657, %v2658
    %v2660 = vrot.slane %v2651, 4
    %v2661 = vadd.f32 %v2651, %v2660
    %v2662 = vrot.slane %v2661, 2
    %v2663 = vadd.f32 %v2661, %v2662
    %v2664 = vrot.slane %v2663, 1
    %v2665 = vadd.f32 %v2663, %v2664
    %v2666 = vrot.slane %v2652, 4
    %v2667 = vadd.f32 %v2652, %v2666
    %v2668 = vrot.slane %v2667, 2
    %v2669 = vadd.f32 %v2667, %v2668
    %v2670 = vrot.slane %v2669, 1
    %v2671 = vadd.f32 %v2669, %v2670
    %v2672 = vrot.slane %v2653, 4
    %v2673 = vadd.f32 %v2653, %v2672
    %v2674 = vrot.slane %v2673, 2
    %v2675 = vadd.f32 %v2673, %v2674
    %v2676 = vrot.slane %v2675, 1
    %v2677 = vadd.f32 %v2675, %v2676
    %v2678 = vmul.f32 %v2659, %v2645
    %v2679 = vmul.f32 %v2665, %v2645
    %v2680 = vmul.f32 %v2671, %v2645
    %v2681 = vmul.f32 %v2677, %v2645
    %v2682 = vmul.f32 %v2609, %v2646
    %v2683 = vmul.f32 %v2609, %v2647
    %v2684 = vmul.f32 %v2609, %v2648
    %v2685 = vmul.f32 %v2609, %v2649
    %v2686 = vmul.f32 %v2610, %v2678
    %v2687 = vmul.f32 %v2610, %v2679
    %v2688 = vmul.f32 %v2610, %v2680
    %v2689 = vmul.f32 %v2610, %v2681
    %v2690 = vadd.f32 %v2682, %v2686
    %v2691 = vadd.f32 %v2683, %v2687
    %v2692 = vadd.f32 %v2684, %v2688
    %v2693 = vadd.f32 %v2685, %v2689
    %v2694 = vsub.f32 %v2545, %v2690
    %v2695 = vsub.f32 %v2565, %v2691
    %v2696 = vsub.f32 %v2585, %v2692
    %v2697 = vsub.f32 %v2605, %v2693
    %v2698 = vmul.f32 %v2694, %v2694
    %v2699 = vmul.f32 %v2695, %v2695
    %v2700 = vmul.f32 %v2696, %v2696
    %v2701 = vmul.f32 %v2697, %v2697
    %v2702 = vmul.f32 %v2698, %v2609
    %v2703 = vmul.f32 %v2699, %v2609
    %v2704 = vmul.f32 %v2700, %v2609
    %v2705 = vmul.f32 %v2701, %v2609
    %v2706 = vrot.slane %v2702, 4
    %v2707 = vadd.f32 %v2702, %v2706
    %v2708 = vrot.slane %v2707, 2
    %v2709 = vadd.f32 %v2707, %v2708
    %v2710 = vrot.slane %v2709, 1
    %v2711 = vadd.f32 %v2709, %v2710
    %v2712 = vrot.slane %v2703, 4
    %v2713 = vadd.f32 %v2703, %v2712
    %v2714 = vrot.slane %v2713, 2
    %v2715 = vadd.f32 %v2713, %v2714
    %v2716 = vrot.slane %v2715, 1
    %v2717 = vadd.f32 %v2715, %v2716
    %v2718 = vrot.slane %v2704, 4
    %v2719 = vadd.f32 %v2704, %v2718
    %v2720 = vrot.slane %v2719, 2
    %v2721 = vadd.f32 %v2719, %v2720
    %v2722 = vrot.slane %v2721, 1
    %v2723 = vadd.f32 %v2721, %v2722
    %v2724 = vrot.slane %v2705, 4
    %v2725 = vadd.f32 %v2705, %v2724
    %v2726 = vrot.slane %v2725, 2
    %v2727 = vadd.f32 %v2725, %v2726
    %v2728 = vrot.slane %v2727, 1
    %v2729 = vadd.f32 %v2727, %v2728
    %v2730 = vmul.f32 %v2711, %v2645
    %v2731 = vmul.f32 %v2717, %v2645
    %v2732 = vmul.f32 %v2723, %v2645
    %v2733 = vmul.f32 %v2729, %v2645
    %v2734 = vmul.f32 %v2698, %v2610
    %v2735 = vmul.f32 %v2699, %v2610
    %v2736 = vmul.f32 %v2700, %v2610
    %v2737 = vmul.f32 %v2701, %v2610
    %v2738 = vrot.slane %v2734, 4
    %v2739 = vadd.f32 %v2734, %v2738
    %v2740 = vrot.slane %v2739, 2
    %v2741 = vadd.f32 %v2739, %v2740
    %v2742 = vrot.slane %v2741, 1
    %v2743 = vadd.f32 %v2741, %v2742
    %v2744 = vrot.slane %v2735, 4
    %v2745 = vadd.f32 %v2735, %v2744
    %v2746 = vrot.slane %v2745, 2
    %v2747 = vadd.f32 %v2745, %v2746
    %v2748 = vrot.slane %v2747, 1
    %v2749 = vadd.f32 %v2747, %v2748
    %v2750 = vrot.slane %v2736, 4
    %v2751 = vadd.f32 %v2736, %v2750
    %v2752 = vrot.slane %v2751, 2
    %v2753 = vadd.f32 %v2751, %v2752
    %v2754 = vrot.slane %v2753, 1
    %v2755 = vadd.f32 %v2753, %v2754
    %v2756 = vrot.slane %v2737, 4
    %v2757 = vadd.f32 %v2737, %v2756
    %v2758 = vrot.slane %v2757, 2
    %v2759 = vadd.f32 %v2757, %v2758
    %v2760 = vrot.slane %v2759, 1
    %v2761 = vadd.f32 %v2759, %v2760
    %v2762 = vmul.f32 %v2743, %v2645
    %v2763 = vmul.f32 %v2749, %v2645
    %v2764 = vmul.f32 %v2755, %v2645
    %v2765 = vmul.f32 %v2761, %v2645
    %v2766 = vmul.f32 %v2609, %v2730
    %v2767 = vmul.f32 %v2609, %v2731
    %v2768 = vmul.f32 %v2609, %v2732
    %v2769 = vmul.f32 %v2609, %v2733
    %v2770 = vmul.f32 %v2610, %v2762
    %v2771 = vmul.f32 %v2610, %v2763
    %v2772 = vmul.f32 %v2610, %v2764
    %v2773 = vmul.f32 %v2610, %v2765
    %v2774 = vadd.f32 %v2766, %v2770
    %v2775 = vadd.f32 %v2767, %v2771
    %v2776 = vadd.f32 %v2768, %v2772
    %v2777 = vadd.f32 %v2769, %v2773
    %v2778 = vadd.f32 %v2774, 1e-05
    %v2779 = vadd.f32 %v2775, 1e-05
    %v2780 = vadd.f32 %v2776, 1e-05
    %v2781 = vadd.f32 %v2777, 1e-05
    %v2782 = vrsqrt.pop %v2778
    %v2783 = vmul.f32 %v2782, %v2778
    %v2784 = vmul.f32 %v2783, %v2782
    %v2785 = vmul.f32 0.5, %v2784
    %v2786 = vsub.f32 1.5, %v2785
    %v2787 = vmul.f32 %v2782, %v2786
    %vm2788 = vweird.f32 %v2778
    %vm2789 = vweird.f32 %v2782
    %vm2790 = vmor %vm2788, %vm2789
    %v2791 = vsel %vm2790, %v2782, %v2787
    %v2792 = vrsqrt.pop %v2779
    %v2793 = vmul.f32 %v2792, %v2779
    %v2794 = vmul.f32 %v2793, %v2792
    %v2795 = vmul.f32 0.5, %v2794
    %v2796 = vsub.f32 1.5, %v2795
    %v2797 = vmul.f32 %v2792, %v2796
    %vm2798 = vweird.f32 %v2779
    %vm2799 = vweird.f32 %v2792
    %vm2800 = vmor %vm2798, %vm2799
    %v2801 = vsel %vm2800, %v2792, %v2797
    %v2802 = vrsqrt.pop %v2780
    %v2803 = vmul.f32 %v2802, %v2780
    %v2804 = vmul.f32 %v2803, %v2802
    %v2805 = vmul.f32 0.5, %v2804
    %v2806 = vsub.f32 1.5, %v2805
    %v2807 = vmul.f32 %v2802, %v2806
    %vm2808 = vweird.f32 %v2780
    %vm2809 = vweird.f32 %v2802
    %vm2810 = vmor %vm2808, %vm2809
    %v2811 = vsel %vm2810, %v2802, %v2807
    %v2812 = vrsqrt.pop %v2781
    %v2813 = vmul.f32 %v2812, %v2781
    %v2814 = vmul.f32 %v2813, %v2812
    %v2815 = vmul.f32 0.5, %v2814
    %v2816 = vsub.f32 1.5, %v2815
    %v2817 = vmul.f32 %v2812, %v2816
    %vm2818 = vweird.f32 %v2781
    %vm2819 = vweird.f32 %v2812
    %vm2820 = vmor %vm2818, %vm2819
    %v2821 = vsel %vm2820, %v2812, %v2817
    %v2822 = vmul.f32 %v2694, %v2791
    %v2823 = vmul.f32 %v2695, %v2801
    %v2824 = vmul.f32 %v2696, %v2811
    %v2825 = vmul.f32 %v2697, %v2821
    %v2826 = vld [vmem:[%s3] sm:$0xf]
    %v2828 = vperm.slane %v2826, 0
    %v2829 = vperm.slane %v2826, 1
    %v2830 = vperm.slane %v2826, 2
    %v2831 = vperm.slane %v2826, 3
    %v2836 = vmul.f32 %v2822, %v2828
    %v2837 = vmul.f32 %v2823, %v2829
    %v2838 = vmul.f32 %v2824, %v2830
    %v2839 = vmul.f32 %v2825, %v2831
    %v2840 = vld [vmem:[%s4] sm:$0xf]
    %v2842 = vperm.slane %v2840, 0
    %v2843 = vperm.slane %v2840, 1
    %v2844 = vperm.slane %v2840, 2
    %v2845 = vperm.slane %v2840, 3
    %v2850 = vadd.f32 %v2836, %v2842
    %v2851 = vadd.f32 %v2837, %v2843
    %v2852 = vadd.f32 %v2838, %v2844
    %v2853 = vadd.f32 %v2839, %v2845
    %v2854 = vmax.f32 %v2850, 0.0
    %v2855 = vmax.f32 %v2851, 0.0
    %v2856 = vmax.f32 %v2852, 0.0
    %v2857 = vmax.f32 %v2853, 0.0
    %v2858 = vld [vmem:[%s5] sm:$0xff]
    %v2859 = vld [vmem:[%s5 + $0x8] sm:$0xff]
    %v2860 = vld [vmem:[%s5 + $0x10] sm:$0xff]
    %v2861 = vld [vmem:[%s5 + $0x18] sm:$0xff]
    %v2862 = vld [vmem:[%s5 + $0x20] sm:$0xff]
    %v2863 = vld [vmem:[%s5 + $0x28] sm:$0xff]
    %v2864 = vld [vmem:[%s5 + $0x30] sm:$0xff]
    %v2865 = vld [vmem:[%s5 + $0x38] sm:$0xff]
    %v2866 = vld [vmem:[%s5 + $0x40] sm:$0xff]
    %v2867 = vld [vmem:[%s5 + $0x48] sm:$0xff]
    %v2868 = vld [vmem:[%s5 + $0x50] sm:$0xff]
    %v2869 = vld [vmem:[%s5 + $0x58] sm:$0xff]
    %v2870 = vld [vmem:[%s5 + $0x60] sm:$0xff]
    %v2871 = vld [vmem:[%s5 + $0x68] sm:$0xff]
    %v2872 = vld [vmem:[%s5 + $0x70] sm:$0xff]
    %v2873 = vld [vmem:[%s5 + $0x78] sm:$0xff]
    %v2874 = vld [vmem:[%s5 + $0x80] sm:$0xff]
    %v2875 = vld [vmem:[%s5 + $0x88] sm:$0xff]
    %v2876 = vld [vmem:[%s5 + $0x90] sm:$0xff]
    %v2877 = vld [vmem:[%s5 + $0x98] sm:$0xff]
    %v2878 = vld [vmem:[%s5 + $0xa0] sm:$0xff]
    %v2879 = vld [vmem:[%s5 + $0xa8] sm:$0xff]
    %v2880 = vld [vmem:[%s5 + $0xb0] sm:$0xff]
    %v2881 = vld [vmem:[%s5 + $0xb8] sm:$0xff]
    %v2882 = vld [vmem:[%s5 + $0xc0] sm:$0xff]
    %v2883 = vld [vmem:[%s5 + $0xc8] sm:$0xff]
    %v2884 = vld [vmem:[%s5 + $0xd0] sm:$0xff]
    %v2885 = vld [vmem:[%s5 + $0xd8] sm:$0xff]
    %v2886 = vld [vmem:[%s5 + $0xe0] sm:$0xff]
    %v2887 = vld [vmem:[%s5 + $0xe8] sm:$0xff]
    %v2888 = vld [vmem:[%s5 + $0xf0] sm:$0xff]
    %v2889 = vld [vmem:[%s5 + $0xf8] sm:$0xff]
    %v2890 = vld [vmem:[%s5 + $0x100] sm:$0xff]
    %v2891 = vld [vmem:[%s5 + $0x108] sm:$0xff]
    %v2892 = vld [vmem:[%s5 + $0x110] sm:$0xff]
    %v2893 = vld [vmem:[%s5 + $0x118] sm:$0xff]
    %v2894 = vld [vmem:[%s5 + $0x120] sm:$0xff]
    %v2895 = vld [vmem:[%s5 + $0x128] sm:$0xff]
    %v2896 = vld [vmem:[%s5 + $0x130] sm:$0xff]
    %v2897 = vld [vmem:[%s5 + $0x138] sm:$0xff]
    %v2898 = vld [vmem:[%s5 + $0x140] sm:$0xff]
    %v2899 = vld [vmem:[%s5 + $0x148] sm:$0xff]
    %v2900 = vld [vmem:[%s5 + $0x150] sm:$0xff]
    %v2901 = vld [vmem:[%s5 + $0x158] sm:$0xff]
    %v2902 = vld [vmem:[%s5 + $0x160] sm:$0xff]
    %v2903 = vld [vmem:[%s5 + $0x168] sm:$0xff]
    %v2904 = vld [vmem:[%s5 + $0x170] sm:$0xff]
    %v2905 = vld [vmem:[%s5 + $0x178] sm:$0xff]
    %v2906 = vld [vmem:[%s5 + $0x180] sm:$0xff]
    %v2907 = vld [vmem:[%s5 + $0x188] sm:$0xff]
    %v2908 = vld [vmem:[%s5 + $0x190] sm:$0xff]
    %v2909 = vld [vmem:[%s5 + $0x198] sm:$0xff]
    %v2910 = vld [vmem:[%s5 + $0x1a0] sm:$0xff]
    %v2911 = vld [vmem:[%s5 + $0x1a8] sm:$0xff]
    %v2912 = vld [vmem:[%s5 + $0x1b0] sm:$0xff]
    %v2913 = vld [vmem:[%s5 + $0x1b8] sm:$0xff]
    %v2914 = vld [vmem:[%s5 + $0x1c0] sm:$0xff]
    %v2915 = vld [vmem:[%s5 + $0x1c8] sm:$0xff]
    %v2916 = vld [vmem:[%s5 + $0x1d0] sm:$0xff]
    %v2917 = vld [vmem:[%s5 + $0x1d8] sm:$0xff]
    %v2918 = vld [vmem:[%s5 + $0x1e0] sm:$0xff]
    %v2919 = vld [vmem:[%s5 + $0x1e8] sm:$0xff]
    %v2920 = vld [vmem:[%s5 + $0x1f0] sm:$0xff]
    %v2921 = vld [vmem:[%s5 + $0x1f8] sm:$0xff]
    %v2922 = vld [vmem:[%s6] sm:$0x1]
    %v2924 = vperm.slane %v2922, 0
    %2926 = vmatpush.msra.mxu0 %v2873
    %2927 = vmatpush.msra.mxu0 %v2872
    %2928 = vmatpush.msra.mxu0 %v2871
    %2929 = vmatpush.msra.mxu0 %v2870
    %2930 = vmatpush.msra.mxu0 %v2869
    %2931 = vmatpush.msra.mxu0 %v2868
    %2932 = vmatpush.msra.mxu0 %v2867
    %2933 = vmatpush.msra.mxu0 %v2866
    %2934 = vmatpush.msra.mxu0 %v2865
    %2935 = vmatpush.msra.mxu0 %v2864
    %2936 = vmatpush.msra.mxu0 %v2863
    %2937 = vmatpush.msra.mxu0 %v2862
    %2938 = vmatpush.msra.mxu0 %v2861
    %2939 = vmatpush.msra.mxu0 %v2860
    %2940 = vmatpush.msra.mxu0 %v2859
    %2941 = vmatpush.msra.mxu0 %v2858
    %2942 = vmatmul.f32.gmra.mxu0 %v2854
    %v2943 = vpop.f32.mrf.mxu0
    %v2944 = vadd.f32 %v2924, %v2943
    %2945 = vdwg.mxu0
    %2946 = vmatpush.msra.mxu0 %v2889
    %2947 = vmatpush.msra.mxu0 %v2888
    %2948 = vmatpush.msra.mxu0 %v2887
    %2949 = vmatpush.msra.mxu0 %v2886
    %2950 = vmatpush.msra.mxu0 %v2885
    %2951 = vmatpush.msra.mxu0 %v2884
    %2952 = vmatpush.msra.mxu0 %v2883
    %2953 = vmatpush.msra.mxu0 %v2882
    %2954 = vmatpush.msra.mxu0 %v2881
    %2955 = vmatpush.msra.mxu0 %v2880
    %2956 = vmatpush.msra.mxu0 %v2879
    %2957 = vmatpush.msra.mxu0 %v2878
    %2958 = vmatpush.msra.mxu0 %v2877
    %2959 = vmatpush.msra.mxu0 %v2876
    %2960 = vmatpush.msra.mxu0 %v2875
    %2961 = vmatpush.msra.mxu0 %v2874
    %2962 = vmatmul.f32.gmra.mxu0 %v2855
    %v2963 = vpop.f32.mrf.mxu0
    %v2964 = vadd.f32 %v2944, %v2963
    %2965 = vdwg.mxu0
    %2966 = vmatpush.msra.mxu0 %v2905
    %2967 = vmatpush.msra.mxu0 %v2904
    %2968 = vmatpush.msra.mxu0 %v2903
    %2969 = vmatpush.msra.mxu0 %v2902
    %2970 = vmatpush.msra.mxu0 %v2901
    %2971 = vmatpush.msra.mxu0 %v2900
    %2972 = vmatpush.msra.mxu0 %v2899
    %2973 = vmatpush.msra.mxu0 %v2898
    %2974 = vmatpush.msra.mxu0 %v2897
    %2975 = vmatpush.msra.mxu0 %v2896
    %2976 = vmatpush.msra.mxu0 %v2895
    %2977 = vmatpush.msra.mxu0 %v2894
    %2978 = vmatpush.msra.mxu0 %v2893
    %2979 = vmatpush.msra.mxu0 %v2892
    %2980 = vmatpush.msra.mxu0 %v2891
    %2981 = vmatpush.msra.mxu0 %v2890
    %2982 = vmatmul.f32.gmra.mxu0 %v2856
    %v2983 = vpop.f32.mrf.mxu0
    %v2984 = vadd.f32 %v2964, %v2983
    %2985 = vdwg.mxu0
    %2986 = vmatpush.msra.mxu0 %v2921
    %2987 = vmatpush.msra.mxu0 %v2920
    %2988 = vmatpush.msra.mxu0 %v2919
    %2989 = vmatpush.msra.mxu0 %v2918
    %2990 = vmatpush.msra.mxu0 %v2917
    %2991 = vmatpush.msra.mxu0 %v2916
    %2992 = vmatpush.msra.mxu0 %v2915
    %2993 = vmatpush.msra.mxu0 %v2914
    %2994 = vmatpush.msra.mxu0 %v2913
    %2995 = vmatpush.msra.mxu0 %v2912
    %2996 = vmatpush.msra.mxu0 %v2911
    %2997 = vmatpush.msra.mxu0 %v2910
    %2998 = vmatpush.msra.mxu0 %v2909
    %2999 = vmatpush.msra.mxu0 %v2908
    %3000 = vmatpush.msra.mxu0 %v2907
    %3001 = vmatpush.msra.mxu0 %v2906
    %3002 = vmatmul.f32.gmra.mxu0 %v2857
    %v3003 = vpop.f32.mrf.mxu0
    %v3004 = vadd.f32 %v2984, %v3003
    %3005 = vdwg.mxu0
    %v3006 = vmul.f32 %v3004, %v3004
    %vm3007 = vcmask 130048
    %v3008 = vsel %vm3007, %v3006, 0.0
    %3009 = vadd.xlane.f32.xlu0 %v3008
    %v3010 = vpop.xlane.xlu0 %3009
    %v3011 = vrsqrt.pop %v3010
    %v3012 = vmul.f32 %v3011, %v3010
    %v3013 = vmul.f32 %v3012, %v3011
    %v3014 = vmul.f32 0.5, %v3013
    %v3015 = vsub.f32 1.5, %v3014
    %v3016 = vmul.f32 %v3011, %v3015
    %v3017 = vmul.f32 %v3010, %v3016
    %vm3018 = vcmp.eq.f32.partialorder %v3010, inf
    %v3019 = vsel %vm3018, %v3010, %v3017
    %vm3020 = vcmp.eq.f32.partialorder %v3010, 0.0
    %v3021 = vand.u32 %v3010, 2147483648
    %v3022 = vsel %vm3020, %v3021, %v3019
    %v3023 = vmax.f32 %v3022, 1e-12
    %v3024 = vrcp.pop %v3023
    %v3025 = vmul.f32 %v3023, %v3024
    %v3026 = vsub.f32 1.0, %v3025
    %v3027 = vmul.f32 %v3024, %v3026
    %v3028 = vadd.f32 %v3024, %v3027
    %vm3029 = vweird.f32 %v3023
    %vm3030 = vweird.f32 %v3024
    %vm3031 = vmor %vm3029, %vm3030
    %v3032 = vsel %vm3031, %v3024, %v3028
    %v3033 = vand.u32 2147483647, %v3023
    %vm3034 = vcmp.eq.f32.partialorder %v3033, 8.507059e+37
    %v3035 = vand.u32 %v3023, 2147483648
    %v3036 = vor.u32 1.1754944e-38, %v3035
    %v3037 = vsel %vm3034, %v3036, %v3032
    %v3038 = vmul.f32 %v3004, %v3037
    %v3040 = vsel %vm3007, %v3038, 0
    %3042 = vmatpush.xpose.msra.mxu0 0.0
    %3043 = vmatpush.xpose.msra.mxu0 0.0
    %3044 = vmatpush.xpose.msra.mxu0 0.0
    %3045 = vmatpush.xpose.msra.mxu0 0.0
    %3046 = vmatpush.xpose.msra.mxu0 0.0
    %3047 = vmatpush.xpose.msra.mxu0 0.0
    %3048 = vmatpush.xpose.msra.mxu0 0.0
    %3049 = vmatpush.xpose.msra.mxu0 0.0
    %3050 = vmatpush.xpose.msra.mxu0 0.0
    %3051 = vmatpush.xpose.msra.mxu0 0.0
    %3052 = vmatpush.xpose.msra.mxu0 0.0
    %3053 = vmatpush.xpose.msra.mxu0 0.0
    %3054 = vmatpush.xpose.msra.mxu0 0.0
    %3055 = vmatpush.xpose.msra.mxu0 0.0
    %3056 = vmatpush.xpose.msra.mxu0 0.0
    %3057 = vmatpush.xpose.msra.mxu0 %v3040
    %3058 = vmatmul.f32.gmra.mxu0 %v3040
    %v3059 = vpop.f32.mrf.mxu0
    %v3060 = vadd.f32 0.0, %v3059
    %3061 = vdwg.mxu0
    %v3062 = vrcp.pop 0.5
    %v3063 = vmul.f32 0.5, %v3062
    %v3064 = vsub.f32 1.0, %v3063
    %v3065 = vmul.f32 %v3062, %v3064
    %v3066 = vadd.f32 %v3062, %v3065
    %vm3067 = vweird.f32 %v3062
    %v3068 = vsel %vm3067, %v3062, %v3066
    %v3069 = vmul.f32 %v3060, %v3068
    %vm3070 = vcmp.eq.s32.totalorder %v2103, %v2105
    %v3071 = vsel %vm3070, -1e+30, %v3069
    %v3072 = vadd.s32 %v2103, 4
    %v3073 = vsub.s32 %v2103, 4
    %v3074 = vsel %vm2607, %v3072, %v3073
    %vm3075 = vcmp.eq.s32.totalorder %v2105, %v3074
    %v3076 = vsel %vm3075, %v3071, 0.0
    %vm3077 = vcmask 64512
    %v3078 = vsel %vm3077, %v3076, 0.0
    %3079 = vadd.xlane.f32.xlu0 %v3078
    %v3080 = vpop.xlane.xlu0 %3079
    %v3081 = vsel %vm3077, %v3071, -inf
    %3082 = vmax.xlane.f32.xlu0 %v3081
    %v3083 = vpop.xlane.xlu0 %3082
    %v3084 = vsub.f32 %v3071, %v3083
    %v3085 = vmul.f32 %v3084, 1.442695
    %v3086 = vpow.pop %v3085
    %v3087 = vsel %vm3077, %v3086, 0.0
    %3088 = vadd.xlane.f32.xlu0 %v3087
    %v3089 = vpop.xlane.xlu0 %3088
    %v3090 = vlog2.pop %v3089
    %v3091 = vmul.f32 %v3090, 0.6931472
    %v3092 = vadd.f32 %v3091, %v3083
    %v3093 = vsub.f32 %v3092, %v3080
    %v3094 = vrot.slane %v3093, 4
    %v3095 = vadd.f32 %v3093, %v3094
    %v3096 = vrot.slane %v3095, 2
    %v3097 = vadd.f32 %v3095, %v3096
    %v3098 = vrot.slane %v3097, 1
    %v3099 = vadd.f32 %v3097, %v3098
    %v3100 = vrcp.pop 8.0
    %v3101 = vmul.f32 8.0, %v3100
    %v3102 = vsub.f32 1.0, %v3101
    %v3103 = vmul.f32 %v3100, %v3102
    %v3104 = vadd.f32 %v3100, %v3103
    %vm3105 = vweird.f32 %v3100
    %v3106 = vsel %vm3105, %v3100, %v3104
    %v3107 = vmul.f32 %v3099, %v3106
    %vm3108 = vcmask 0
    %3109 = vst.msk [vmem:[#allocation2] sm:$0x1] %vm3108, %v3107
    // Predicated region
    $region30: #{simclr_forward.1} parent=1 // pred_check
      _
    $region31: #{simclr_forward.1} parent=1 // pred_check_branch
      %3111 = sbr.rel (0) target = $region33
    $region32: #{simclr_forward.1} parent=1 // pred_region
      %3113 = vsyncadd [#allocation3], 0
      %s3115 = sshll.u32 [#allocation2], 4
      %s3116 = int_to_ptr.vmem [resolvable:$true] %s3115
      %s3117 = sshll.u32 %s7, 4
      %s3118 = int_to_ptr.hbm [resolvable:$true] %s3117
      %3120 = dma.vmem_to_hbm [thread:$0]  %s3116, 16, %s3118, [#allocation3]
    $region33: #{simclr_forward.1} parent=1 // pred_fallthru
      _
    // Predicated region
    $region34: #{simclr_forward.1} parent=1 // pred_check
      _
    $region35: #{simclr_forward.1} parent=1 // pred_check_branch
      %3122 = sbr.rel (0) target = $region37
    $region36: #{simclr_forward.1} parent=1 // pred_region
      %3124 = dma.done [#allocation3], 16
    $region37: #{simclr_forward.1} parent=1 // pred_fallthru
      _
    %3125 = vsyncpa [#allocation3], 1

</llo_original>
